<compile_context>
chip_gen: v7x
topology: tpu7x:2x2x1
jax: 0.10.0
libtpu: 0.0.40
codegen_flags: <defaults>
</compile_context>

<pallas_src>
import functools

import jax
import jax.numpy as jnp
from jax.experimental import pallas as pl
from jax.experimental.pallas import tpu as pltpu

_BN_EPS = 1e-5
_LANE = 128
_MM_DTYPE = jnp.bfloat16   # MXU operand dtype; accumulation is always f32.


def _round_up(x, m):
    return (x + m - 1) // m * m


def _stage1_kernel(xpad_ref, w1_ref, w2_ref, w3_ref,
                   xb_ref, yb_ref, stats_ref, *, H, W, Cin_p, Cout_p):
    """Per batch element: pooled 1x1 conv, im2col 3x3/stride-2 conv (both raw,
    un-normalized), per-sample BN statistics, and the sigmoid(global-pool) gate."""
    Hh, Wh = H // 2, W // 2
    R = Hh * Wh
    mm = w1_ref.dtype

    # Load the nine stride-2 taps of the zero-padded input exactly once; the
    # 2x2 average pool reuses the four (kh, kw) in {1,2}x{1,2} taps.
    taps = []
    for kh in range(3):
        for kw in range(3):
            t = xpad_ref[:, pl.ds(kh, Hh, 2), pl.ds(kw, Wh, 2), :]
            taps.append(t.reshape(R, Cin_p).astype(jnp.float32))

    # branch x: 2x2 / stride-2 average pool -> 1x1 conv (BN applied in stage 2).
    p = (taps[4] + taps[5] + taps[7] + taps[8]) * 0.25                # (R, Cin_p) f32
    xb = jnp.dot(p.astype(mm), w1_ref[...],
                 preferred_element_type=jnp.float32)                  # (R, Cout_p)

    # branch y: 3x3 / stride-2 conv as a single deep-K im2col matmul.
    col = jnp.concatenate([t.astype(mm) for t in taps], axis=1)       # (R, 9*Cin_p)
    yb = jnp.dot(col, w2_ref[...],
                 preferred_element_type=jnp.float32)                  # (R, Cout_p)

    # branch z: global average pool == mean of the pooled tensor (H, W even),
    # then 1x1 conv (no bias) and sigmoid.
    zmean = jnp.mean(p, axis=0, keepdims=True)                        # (1, Cin_p)
    z = jax.nn.sigmoid(jnp.dot(zmean.astype(mm), w3_ref[...],
                               preferred_element_type=jnp.float32))   # (1, Cout_p)

    xb_ref[0] = xb
    yb_ref[0] = yb
    # Per-sample partial BN statistics (summed over the batch on the host).
    stats_ref[0, 0:1, :] = jnp.sum(xb, axis=0, keepdims=True)
    stats_ref[0, 1:2, :] = jnp.sum(xb * xb, axis=0, keepdims=True)
    stats_ref[0, 2:3, :] = jnp.sum(yb, axis=0, keepdims=True)
    stats_ref[0, 3:4, :] = jnp.sum(yb * yb, axis=0, keepdims=True)
    stats_ref[0, 4:5, :] = z
    stats_ref[0, 5:8, :] = jnp.zeros((3, Cout_p), jnp.float32)


def _stage2_kernel(xb_ref, yb_ref, z_ref, coef_ref, out_ref):
    """Apply the (per-channel affine) BatchNorms, combine, gate with z, SiLU."""
    a = (xb_ref[0] * coef_ref[0:1, :]
         + yb_ref[0] * coef_ref[1:2, :]
         + coef_ref[2:3, :])
    b = a * z_ref[0]                        # (1, Cout_p) broadcast over rows
    out_ref[0] = b * jax.nn.sigmoid(b)      # SiLU


def _unpack(params):
    return (params["w1"], params["g1"], params["b1"], params["w2"],
            params["g2"], params["b2"], params["w3"])


@jax.jit
def downsample_forward(x_nchw, params):
    """Pallas implementation. x_nchw: (N, Cin, H, W) f32 -> (N, Cout, H/2, W/2)."""
    w1, g1, b1, w2, g2, b2, w3 = _unpack(params)
    N, Cin, H, W = x_nchw.shape
    Cout = w1.shape[0]
    assert H % 2 == 0 and W % 2 == 0, "Downsample expects even spatial dims"
    Hh, Wh = H // 2, W // 2
    R = Hh * Wh
    Cin_p, Cout_p = _round_up(Cin, _LANE), _round_up(Cout, _LANE)

    # ---- glue: NCHW -> NHWC, zero-pad spatial by 1 and channels to lane width.
    x = jnp.transpose(x_nchw, (0, 2, 3, 1)).astype(jnp.float32)
    xpad = jnp.pad(x, ((0, 0), (1, 1), (1, 1), (0, Cin_p - Cin)))

    # ---- repack weights channels-last, lane-padded, bf16 MXU operands.
    w1_k = jnp.pad(w1[:, :, 0, 0].T,
                   ((0, Cin_p - Cin), (0, Cout_p - Cout))).astype(_MM_DTYPE)
    w3_k = jnp.pad(w3[:, :, 0, 0].T,
                   ((0, Cin_p - Cin), (0, Cout_p - Cout))).astype(_MM_DTYPE)
    w2_k = jnp.pad(jnp.transpose(w2, (2, 3, 1, 0)),           # (kh, kw, cin, cout)
                   ((0, 0), (0, 0), (0, Cin_p - Cin), (0, Cout_p - Cout)))
    w2_k = w2_k.reshape(9 * Cin_p, Cout_p).astype(_MM_DTYPE)  # row = (kh*3+kw)*Cin_p + c
    g1_p = jnp.pad(g1, (0, Cout_p - Cout))
    b1_p = jnp.pad(b1, (0, Cout_p - Cout))
    g2_p = jnp.pad(g2, (0, Cout_p - Cout))
    b2_p = jnp.pad(b2, (0, Cout_p - Cout))

    # ---- stage 1: raw convs + per-sample BN stats + z gate (grid over batch).
    est1 = (2 * ((H + 2) * (W + 2) * Cin_p * 4                 # input block (dbl-buf)
                 + 2 * R * Cout_p * 4 + 8 * Cout_p * 4)        # output blocks
            + 11 * Cin_p * Cout_p * 2                          # bf16 weights
            + 9 * R * Cin_p * 4 + 9 * R * Cin_p * 2            # taps + im2col
            + 2 * R * Cout_p * 4)                              # xb / yb temporaries
    cp1 = pltpu.CompilerParams(
        dimension_semantics=("parallel",),
        vmem_limit_bytes=int(min(64 << 20, max(32 << 20, 2 * est1))))
    xb_raw, yb_raw, stats = pl.pallas_call(
        functools.partial(_stage1_kernel, H=H, W=W, Cin_p=Cin_p, Cout_p=Cout_p),
        grid=(N,),
        in_specs=(
            pl.BlockSpec((1, H + 2, W + 2, Cin_p), lambda n: (n, 0, 0, 0)),
            pl.BlockSpec((Cin_p, Cout_p), lambda n: (0, 0)),
            pl.BlockSpec((9 * Cin_p, Cout_p), lambda n: (0, 0)),
            pl.BlockSpec((Cin_p, Cout_p), lambda n: (0, 0)),
        ),
        out_specs=(
            pl.BlockSpec((1, R, Cout_p), lambda n: (n, 0, 0)),
            pl.BlockSpec((1, R, Cout_p), lambda n: (n, 0, 0)),
            pl.BlockSpec((1, 8, Cout_p), lambda n: (n, 0, 0)),
        ),
        out_shape=(
            jax.ShapeDtypeStruct((N, R, Cout_p), jnp.float32),
            jax.ShapeDtypeStruct((N, R, Cout_p), jnp.float32),
            jax.ShapeDtypeStruct((N, 8, Cout_p), jnp.float32),
        ),
        compiler_params=cp1,
    )(xpad, w1_k, w2_k, w3_k)

    # ---- tiny per-channel host step: fold BN (batch stats, biased var) into
    #      affine scale/shift. bn1(xb)+bn2(yb) = s1*xb + s2*yb + shift.
    cnt = float(N * R)
    ssum = jnp.sum(stats, axis=0)                                   # (8, Cout_p)
    mu1, mu2 = ssum[0] / cnt, ssum[2] / cnt
    # TODO(synk): E[x^2]-E[x]^2 can lose precision for huge activation scales;
    # fine at these magnitudes (reference-checked), use Welford stats otherwise.
    var1 = jnp.maximum(ssum[1] / cnt - mu1 * mu1, 0.0)
    var2 = jnp.maximum(ssum[3] / cnt - mu2 * mu2, 0.0)
    scale1 = g1_p * jax.lax.rsqrt(var1 + _BN_EPS)
    scale2 = g2_p * jax.lax.rsqrt(var2 + _BN_EPS)
    shift = (b1_p - mu1 * scale1) + (b2_p - mu2 * scale2)
    coef = jnp.concatenate(
        [scale1[None], scale2[None], shift[None],
         jnp.zeros((5, Cout_p), jnp.float32)], axis=0)              # (8, Cout_p)
    z3 = stats[:, 4:5, :]                                           # (N, 1, Cout_p)

    # ---- stage 2: normalize + combine + gate + SiLU (grid over batch).
    est2 = 2 * (4 * R * Cout_p * 4 + Cout_p * 4) + 8 * Cout_p * 4
    cp2 = pltpu.CompilerParams(
        dimension_semantics=("parallel",),
        vmem_limit_bytes=int(min(64 << 20, max(32 << 20, 2 * est2))))
    out_flat = pl.pallas_call(
        _stage2_kernel,
        grid=(N,),
        in_specs=(
            pl.BlockSpec((1, R, Cout_p), lambda n: (n, 0, 0)),
            pl.BlockSpec((1, R, Cout_p), lambda n: (n, 0, 0)),
            pl.BlockSpec((1, 1, Cout_p), lambda n: (n, 0, 0)),
            pl.BlockSpec((8, Cout_p), lambda n: (0, 0)),
        ),
        out_specs=pl.BlockSpec((1, R, Cout_p), lambda n: (n, 0, 0)),
        out_shape=jax.ShapeDtypeStruct((N, R, Cout_p), jnp.float32),
        compiler_params=cp2,
    )(xb_raw, yb_raw, z3, coef)

    # Kernel store is lane-dense (rows, Cout_p); un-pad + NCHW transpose stays
    # in the wrapper because the module contract is NCHW output.
    out = out_flat.reshape(N, Hh, Wh, Cout_p)[..., :Cout]
    return jnp.transpose(out, (0, 3, 1, 2))


def downsample_reference(x, params):
    """Pure-JAX (NCHW) reference of the PyTorch forward, for verification."""
    w1, g1, b1, w2, g2, b2, w3 = _unpack(params)
    N, Cin, H, W = x.shape
    dn = ("NCHW", "OIHW", "NCHW")

    def bn(t, g, b):
        mu = jnp.mean(t, axis=(0, 2, 3), keepdims=True)
        var = jnp.mean((t - mu) ** 2, axis=(0, 2, 3), keepdims=True)
        return ((t - mu) * jax.lax.rsqrt(var + _BN_EPS) * g.reshape(1, -1, 1, 1)
                + b.reshape(1, -1, 1, 1))

    avg = x.reshape(N, Cin, H // 2, 2, W // 2, 2).mean(axis=(3, 5))
    xb = bn(jax.lax.conv_general_dilated(avg, w1, (1, 1), "VALID",
                                         dimension_numbers=dn,
                                         precision=jax.lax.Precision.HIGHEST),
            g1, b1)
    yb = bn(jax.lax.conv_general_dilated(x, w2, (2, 2), ((1, 1), (1, 1)),
                                         dimension_numbers=dn,
                                         precision=jax.lax.Precision.HIGHEST),
            g2, b2)
    z = jax.nn.sigmoid(jnp.mean(x, axis=(2, 3)) @ w3[:, :, 0, 0].T)[:, :, None, None]
    b = (xb + yb) * z
    return b * jax.nn.sigmoid(b)


if __name__ == "__main__":
    N, Cin, Cout, H, W = 2, 4, 8, 16, 16
    key = jax.random.PRNGKey(0)
    kx, k1, k2, k3, k4, k5, k6, k7 = jax.random.split(key, 8)
    params = dict(
        w1=0.3 * jax.random.normal(k1, (Cout, Cin, 1, 1), jnp.float32),
        w2=0.2 * jax.random.normal(k2, (Cout, Cin, 3, 3), jnp.float32),
        w3=0.3 * jax.random.normal(k3, (Cout, Cin, 1, 1), jnp.float32),
        g1=1.0 + 0.1 * jax.random.normal(k4, (Cout,), jnp.float32),
        b1=0.1 * jax.random.normal(k5, (Cout,), jnp.float32),
        g2=1.0 + 0.1 * jax.random.normal(k6, (Cout,), jnp.float32),
        b2=0.1 * jax.random.normal(k7, (Cout,), jnp.float32),
    )
    x = jax.random.normal(kx, (N, Cin, H, W), jnp.float32)

    out = jax.block_until_ready(downsample_forward(x, params))
    ref = jax.block_until_ready(downsample_reference(x, params))
    assert out.shape == (N, Cout, H // 2, W // 2), out.shape
    max_err = float(jnp.max(jnp.abs(out - ref)))
    # bf16 MXU operands (f32 accumulation) vs an f32 reference -> bf16-level tol.
    if not jnp.allclose(out, ref, atol=2e-2, rtol=2e-2):
        raise AssertionError(f"kernel mismatch vs reference, max abs err {max_err}")
    print("KERNEL_OK")
</pallas_src>

<mosaic_0001>
module attributes {stable_mosaic.version = 11 : i64} {
  func.func @_stage1_kernel(%arg0: i32, %arg1: memref<1x18x18x128xf32, #tpu.memory_space<vmem>>, %arg2: memref<128x128xbf16, #tpu.memory_space<vmem>>, %arg3: memref<1152x128xbf16, #tpu.memory_space<vmem>>, %arg4: memref<128x128xbf16, #tpu.memory_space<vmem>>, %arg5: memref<1x64x128xf32, #tpu.memory_space<vmem>>, %arg6: memref<1x64x128xf32, #tpu.memory_space<vmem>>, %arg7: memref<1x8x128xf32, #tpu.memory_space<vmem>>) attributes {dimension_semantics = [#tpu.dimension_semantics<parallel>], iteration_bounds = array<i64: 2>, scalar_prefetch = 0 : i64, scratch_operands = 0 : i64, tpu.core_type = #tpu.core_type<tc>, window_params = [{transform_indices = @transform_0, window_bounds = array<i64: 1, 18, 18, 128>}, {pipeline_mode = #tpu.pipeline_mode<synchronous>, transform_indices = @transform_1, window_bounds = array<i64: 128, 128>}, {pipeline_mode = #tpu.pipeline_mode<synchronous>, transform_indices = @transform_2, window_bounds = array<i64: 1152, 128>}, {pipeline_mode = #tpu.pipeline_mode<synchronous>, transform_indices = @transform_3, window_bounds = array<i64: 128, 128>}, {transform_indices = @transform_4, window_bounds = array<i64: 1, 64, 128>}, {transform_indices = @transform_5, window_bounds = array<i64: 1, 64, 128>}, {transform_indices = @transform_6, window_bounds = array<i64: 1, 8, 128>}]} {
    %c0 = arith.constant 0 : index
    %c0_0 = arith.constant 0 : index
    %c0_1 = arith.constant 0 : index
    %c0_2 = arith.constant 0 : index
    %0 = tpu.strided_load %arg1[%c0, %c0_0, %c0_1, %c0_2] {strides = array<i32: 1, 2, 2, 1>} : memref<1x18x18x128xf32, #tpu.memory_space<vmem>>, vector<1x8x8x128xf32>
    %1 = vector.shape_cast %0 : vector<1x8x8x128xf32> to vector<64x128xf32>
    %c0_3 = arith.constant 0 : index
    %c0_4 = arith.constant 0 : index
    %c1 = arith.constant 1 : index
    %c0_5 = arith.constant 0 : index
    %2 = tpu.strided_load %arg1[%c0_3, %c0_4, %c1, %c0_5] {strides = array<i32: 1, 2, 2, 1>} : memref<1x18x18x128xf32, #tpu.memory_space<vmem>>, vector<1x8x8x128xf32>
    %3 = vector.shape_cast %2 : vector<1x8x8x128xf32> to vector<64x128xf32>
    %c0_6 = arith.constant 0 : index
    %c0_7 = arith.constant 0 : index
    %c2 = arith.constant 2 : index
    %c0_8 = arith.constant 0 : index
    %4 = tpu.strided_load %arg1[%c0_6, %c0_7, %c2, %c0_8] {strides = array<i32: 1, 2, 2, 1>} : memref<1x18x18x128xf32, #tpu.memory_space<vmem>>, vector<1x8x8x128xf32>
    %5 = vector.shape_cast %4 : vector<1x8x8x128xf32> to vector<64x128xf32>
    %c0_9 = arith.constant 0 : index
    %c1_10 = arith.constant 1 : index
    %c0_11 = arith.constant 0 : index
    %c0_12 = arith.constant 0 : index
    %6 = tpu.strided_load %arg1[%c0_9, %c1_10, %c0_11, %c0_12] {strides = array<i32: 1, 2, 2, 1>} : memref<1x18x18x128xf32, #tpu.memory_space<vmem>>, vector<1x8x8x128xf32>
    %7 = vector.shape_cast %6 : vector<1x8x8x128xf32> to vector<64x128xf32>
    %c0_13 = arith.constant 0 : index
    %c1_14 = arith.constant 1 : index
    %c1_15 = arith.constant 1 : index
    %c0_16 = arith.constant 0 : index
    %8 = tpu.strided_load %arg1[%c0_13, %c1_14, %c1_15, %c0_16] {strides = array<i32: 1, 2, 2, 1>} : memref<1x18x18x128xf32, #tpu.memory_space<vmem>>, vector<1x8x8x128xf32>
    %9 = vector.shape_cast %8 : vector<1x8x8x128xf32> to vector<64x128xf32>
    %c0_17 = arith.constant 0 : index
    %c1_18 = arith.constant 1 : index
    %c2_19 = arith.constant 2 : index
    %c0_20 = arith.constant 0 : index
    %10 = tpu.strided_load %arg1[%c0_17, %c1_18, %c2_19, %c0_20] {strides = array<i32: 1, 2, 2, 1>} : memref<1x18x18x128xf32, #tpu.memory_space<vmem>>, vector<1x8x8x128xf32>
    %11 = vector.shape_cast %10 : vector<1x8x8x128xf32> to vector<64x128xf32>
    %c0_21 = arith.constant 0 : index
    %c2_22 = arith.constant 2 : index
    %c0_23 = arith.constant 0 : index
    %c0_24 = arith.constant 0 : index
    %12 = tpu.strided_load %arg1[%c0_21, %c2_22, %c0_23, %c0_24] {strides = array<i32: 1, 2, 2, 1>} : memref<1x18x18x128xf32, #tpu.memory_space<vmem>>, vector<1x8x8x128xf32>
    %13 = vector.shape_cast %12 : vector<1x8x8x128xf32> to vector<64x128xf32>
    %c0_25 = arith.constant 0 : index
    %c2_26 = arith.constant 2 : index
    %c1_27 = arith.constant 1 : index
    %c0_28 = arith.constant 0 : index
    %14 = tpu.strided_load %arg1[%c0_25, %c2_26, %c1_27, %c0_28] {strides = array<i32: 1, 2, 2, 1>} : memref<1x18x18x128xf32, #tpu.memory_space<vmem>>, vector<1x8x8x128xf32>
    %15 = vector.shape_cast %14 : vector<1x8x8x128xf32> to vector<64x128xf32>
    %c0_29 = arith.constant 0 : index
    %c2_30 = arith.constant 2 : index
    %c2_31 = arith.constant 2 : index
    %c0_32 = arith.constant 0 : index
    %16 = tpu.strided_load %arg1[%c0_29, %c2_30, %c2_31, %c0_32] {strides = array<i32: 1, 2, 2, 1>} : memref<1x18x18x128xf32, #tpu.memory_space<vmem>>, vector<1x8x8x128xf32>
    %17 = vector.shape_cast %16 : vector<1x8x8x128xf32> to vector<64x128xf32>
    %18 = arith.addf %9, %11 : vector<64x128xf32>
    %19 = arith.addf %18, %15 : vector<64x128xf32>
    %20 = arith.addf %19, %17 : vector<64x128xf32>
    %cst = arith.constant 2.500000e-01 : f32
    %21 = vector.broadcast %cst : f32 to vector<64x128xf32>
    %22 = arith.mulf %20, %21 : vector<64x128xf32>
    %23 = arith.truncf %22 : vector<64x128xf32> to vector<64x128xbf16>
    %c0_33 = arith.constant 0 : index
    %c0_34 = arith.constant 0 : index
    %24 = vector.load %arg2[%c0_33, %c0_34] : memref<128x128xbf16, #tpu.memory_space<vmem>>, vector<128x128xbf16>
    %cst_35 = arith.constant dense<0.000000e+00> : vector<64x128xf32>
    %25 = tpu.matmul %23, %24, %cst_35 {dimension_numbers = #tpu.dot_dimension_numbers<[1], [0], [0], [1], [0, 0, 1, 1], [], []>} : vector<64x128xbf16>, vector<128x128xbf16>, vector<64x128xf32> -> vector<64x128xf32>
    %26 = arith.truncf %1 : vector<64x128xf32> to vector<64x128xbf16>
    %27 = arith.truncf %3 : vector<64x128xf32> to vector<64x128xbf16>
    %28 = arith.truncf %5 : vector<64x128xf32> to vector<64x128xbf16>
    %29 = arith.truncf %7 : vector<64x128xf32> to vector<64x128xbf16>
    %30 = arith.truncf %9 : vector<64x128xf32> to vector<64x128xbf16>
    %31 = arith.truncf %11 : vector<64x128xf32> to vector<64x128xbf16>
    %32 = arith.truncf %13 : vector<64x128xf32> to vector<64x128xbf16>
    %33 = arith.truncf %15 : vector<64x128xf32> to vector<64x128xbf16>
    %34 = arith.truncf %17 : vector<64x128xf32> to vector<64x128xbf16>
    %35 = tpu.concatenate %26, %27, %28, %29, %30, %31, %32, %33, %34 in 1 : vector<64x128xbf16>, vector<64x128xbf16>, vector<64x128xbf16>, vector<64x128xbf16>, vector<64x128xbf16>, vector<64x128xbf16>, vector<64x128xbf16>, vector<64x128xbf16>, vector<64x128xbf16> -> vector<64x1152xbf16>
    %c0_36 = arith.constant 0 : index
    %c0_37 = arith.constant 0 : index
    %36 = vector.load %arg3[%c0_36, %c0_37] : memref<1152x128xbf16, #tpu.memory_space<vmem>>, vector<1152x128xbf16>
    %cst_38 = arith.constant dense<0.000000e+00> : vector<64x128xf32>
    %37 = tpu.matmul %35, %36, %cst_38 {dimension_numbers = #tpu.dot_dimension_numbers<[1], [0], [0], [1], [0, 0, 1, 1], [], []>} : vector<64x1152xbf16>, vector<1152x128xbf16>, vector<64x128xf32> -> vector<64x128xf32>
    %cst_39 = arith.constant dense<0.000000e+00> : vector<128xf32>
    %38 = vector.multi_reduction <add>, %22, %cst_39 [0] : vector<64x128xf32> to vector<128xf32>
    %39 = vector.shape_cast %38 : vector<128xf32> to vector<1x128xf32>
    %cst_40 = arith.constant 6.400000e+01 : f32
    %40 = vector.broadcast %cst_40 : f32 to vector<1x128xf32>
    %41 = arith.divf %39, %40 : vector<1x128xf32>
    %42 = arith.truncf %41 : vector<1x128xf32> to vector<1x128xbf16>
    %c0_41 = arith.constant 0 : index
    %c0_42 = arith.constant 0 : index
    %43 = vector.load %arg4[%c0_41, %c0_42] : memref<128x128xbf16, #tpu.memory_space<vmem>>, vector<128x128xbf16>
    %cst_43 = arith.constant dense<0.000000e+00> : vector<1x128xf32>
    %44 = tpu.matmul %42, %43, %cst_43 {dimension_numbers = #tpu.dot_dimension_numbers<[1], [0], [0], [1], [0, 0, 1, 1], [], []>} : vector<1x128xbf16>, vector<128x128xbf16>, vector<1x128xf32> -> vector<1x128xf32>
    %45 = arith.negf %44 : vector<1x128xf32>
    %46 = math.exp %45 : vector<1x128xf32>
    %cst_44 = arith.constant 1.000000e+00 : f32
    %47 = vector.broadcast %cst_44 : f32 to vector<1x128xf32>
    %48 = arith.addf %47, %46 : vector<1x128xf32>
    %49 = arith.divf %47, %48 : vector<1x128xf32>
    %c0_45 = arith.constant 0 : index
    %c0_46 = arith.constant 0 : index
    %c0_47 = arith.constant 0 : index
    %50 = vector.load %arg5[%c0_45, %c0_46, %c0_47] : memref<1x64x128xf32, #tpu.memory_space<vmem>>, vector<1x64x128xf32>
    %51 = vector.shape_cast %50 : vector<1x64x128xf32> to vector<64x128xf32>
    %52 = vector.shape_cast %25 : vector<64x128xf32> to vector<1x64x128xf32>
    tpu.vector_store %arg5[%c0_45, %c0_46, %c0_47], %52 {strides = array<i32>} : memref<1x64x128xf32, #tpu.memory_space<vmem>>, vector<1x64x128xf32>,
    %c0_48 = arith.constant 0 : index
    %c0_49 = arith.constant 0 : index
    %c0_50 = arith.constant 0 : index
    %53 = vector.load %arg6[%c0_48, %c0_49, %c0_50] : memref<1x64x128xf32, #tpu.memory_space<vmem>>, vector<1x64x128xf32>
    %54 = vector.shape_cast %53 : vector<1x64x128xf32> to vector<64x128xf32>
    %55 = vector.shape_cast %37 : vector<64x128xf32> to vector<1x64x128xf32>
    tpu.vector_store %arg6[%c0_48, %c0_49, %c0_50], %55 {strides = array<i32>} : memref<1x64x128xf32, #tpu.memory_space<vmem>>, vector<1x64x128xf32>,
    %cst_51 = arith.constant dense<0.000000e+00> : vector<128xf32>
    %56 = vector.multi_reduction <add>, %25, %cst_51 [0] : vector<64x128xf32> to vector<128xf32>
    %57 = vector.shape_cast %56 : vector<128xf32> to vector<1x128xf32>
    %c0_52 = arith.constant 0 : index
    %c0_53 = arith.constant 0 : index
    %c0_54 = arith.constant 0 : index
    %58 = vector.load %arg7[%c0_52, %c0_53, %c0_54] : memref<1x8x128xf32, #tpu.memory_space<vmem>>, vector<1x1x128xf32>
    %59 = vector.shape_cast %58 : vector<1x1x128xf32> to vector<1x128xf32>
    %60 = vector.shape_cast %57 : vector<1x128xf32> to vector<1x1x128xf32>
    tpu.vector_store %arg7[%c0_52, %c0_53, %c0_54], %60 {strides = array<i32>} : memref<1x8x128xf32, #tpu.memory_space<vmem>>, vector<1x1x128xf32>,
    %61 = arith.mulf %25, %25 : vector<64x128xf32>
    %cst_55 = arith.constant dense<0.000000e+00> : vector<128xf32>
    %62 = vector.multi_reduction <add>, %61, %cst_55 [0] : vector<64x128xf32> to vector<128xf32>
    %63 = vector.shape_cast %62 : vector<128xf32> to vector<1x128xf32>
    %c0_56 = arith.constant 0 : index
    %c1_57 = arith.constant 1 : index
    %c0_58 = arith.constant 0 : index
    %64 = vector.load %arg7[%c0_56, %c1_57, %c0_58] : memref<1x8x128xf32, #tpu.memory_space<vmem>>, vector<1x1x128xf32>
    %65 = vector.shape_cast %64 : vector<1x1x128xf32> to vector<1x128xf32>
    %66 = vector.shape_cast %63 : vector<1x128xf32> to vector<1x1x128xf32>
    tpu.vector_store %arg7[%c0_56, %c1_57, %c0_58], %66 {strides = array<i32>} : memref<1x8x128xf32, #tpu.memory_space<vmem>>, vector<1x1x128xf32>,
    %cst_59 = arith.constant dense<0.000000e+00> : vector<128xf32>
    %67 = vector.multi_reduction <add>, %37, %cst_59 [0] : vector<64x128xf32> to vector<128xf32>
    %68 = vector.shape_cast %67 : vector<128xf32> to vector<1x128xf32>
    %c0_60 = arith.constant 0 : index
    %c2_61 = arith.constant 2 : index
    %c0_62 = arith.constant 0 : index
    %69 = vector.load %arg7[%c0_60, %c2_61, %c0_62] : memref<1x8x128xf32, #tpu.memory_space<vmem>>, vector<1x1x128xf32>
    %70 = vector.shape_cast %69 : vector<1x1x128xf32> to vector<1x128xf32>
    %71 = vector.shape_cast %68 : vector<1x128xf32> to vector<1x1x128xf32>
    tpu.vector_store %arg7[%c0_60, %c2_61, %c0_62], %71 {strides = array<i32>} : memref<1x8x128xf32, #tpu.memory_space<vmem>>, vector<1x1x128xf32>,
    %72 = arith.mulf %37, %37 : vector<64x128xf32>
    %cst_63 = arith.constant dense<0.000000e+00> : vector<128xf32>
    %73 = vector.multi_reduction <add>, %72, %cst_63 [0] : vector<64x128xf32> to vector<128xf32>
    %74 = vector.shape_cast %73 : vector<128xf32> to vector<1x128xf32>
    %c0_64 = arith.constant 0 : index
    %c3 = arith.constant 3 : index
    %c0_65 = arith.constant 0 : index
    %75 = vector.load %arg7[%c0_64, %c3, %c0_65] : memref<1x8x128xf32, #tpu.memory_space<vmem>>, vector<1x1x128xf32>
    %76 = vector.shape_cast %75 : vector<1x1x128xf32> to vector<1x128xf32>
    %77 = vector.shape_cast %74 : vector<1x128xf32> to vector<1x1x128xf32>
    tpu.vector_store %arg7[%c0_64, %c3, %c0_65], %77 {strides = array<i32>} : memref<1x8x128xf32, #tpu.memory_space<vmem>>, vector<1x1x128xf32>,
    %c0_66 = arith.constant 0 : index
    %c4 = arith.constant 4 : index
    %c0_67 = arith.constant 0 : index
    %78 = vector.load %arg7[%c0_66, %c4, %c0_67] : memref<1x8x128xf32, #tpu.memory_space<vmem>>, vector<1x1x128xf32>
    %79 = vector.shape_cast %78 : vector<1x1x128xf32> to vector<1x128xf32>
    %80 = vector.shape_cast %49 : vector<1x128xf32> to vector<1x1x128xf32>
    tpu.vector_store %arg7[%c0_66, %c4, %c0_67], %80 {strides = array<i32>} : memref<1x8x128xf32, #tpu.memory_space<vmem>>, vector<1x1x128xf32>,
    %cst_68 = arith.constant 0.000000e+00 : f32
    %81 = vector.broadcast %cst_68 : f32 to vector<3x128xf32>
    %c0_69 = arith.constant 0 : index
    %c5 = arith.constant 5 : index
    %c0_70 = arith.constant 0 : index
    %82 = vector.load %arg7[%c0_69, %c5, %c0_70] : memref<1x8x128xf32, #tpu.memory_space<vmem>>, vector<1x3x128xf32>
    %83 = vector.shape_cast %82 : vector<1x3x128xf32> to vector<3x128xf32>
    %84 = vector.shape_cast %81 : vector<3x128xf32> to vector<1x3x128xf32>
    tpu.vector_store %arg7[%c0_69, %c5, %c0_70], %84 {strides = array<i32>} : memref<1x8x128xf32, #tpu.memory_space<vmem>>, vector<1x3x128xf32>,
    return
  }
  func.func @transform_0(%arg0: i32) -> (i32, i32, i32, i32) {
    %c0_i32 = arith.constant 0 : i32
    %c0_i32_0 = arith.constant 0 : i32
    %c0_i32_1 = arith.constant 0 : i32
    %c0_i32_2 = arith.constant 0 : i32
    return %arg0, %c0_i32, %c0_i32_0, %c0_i32_1 : i32, i32, i32, i32
  }
  func.func @transform_1(%arg0: i32) -> (i32, i32) {
    %c0_i32 = arith.constant 0 : i32
    %c0_i32_0 = arith.constant 0 : i32
    %c0_i32_1 = arith.constant 0 : i32
    return %c0_i32, %c0_i32_0 : i32, i32
  }
  func.func @transform_2(%arg0: i32) -> (i32, i32) {
    %c0_i32 = arith.constant 0 : i32
    %c0_i32_0 = arith.constant 0 : i32
    %c0_i32_1 = arith.constant 0 : i32
    return %c0_i32, %c0_i32_0 : i32, i32
  }
  func.func @transform_3(%arg0: i32) -> (i32, i32) {
    %c0_i32 = arith.constant 0 : i32
    %c0_i32_0 = arith.constant 0 : i32
    %c0_i32_1 = arith.constant 0 : i32
    return %c0_i32, %c0_i32_0 : i32, i32
  }
  func.func @transform_4(%arg0: i32) -> (i32, i32, i32) {
    %c0_i32 = arith.constant 0 : i32
    %c0_i32_0 = arith.constant 0 : i32
    %c0_i32_1 = arith.constant 0 : i32
    return %arg0, %c0_i32, %c0_i32_0 : i32, i32, i32
  }
  func.func @transform_5(%arg0: i32) -> (i32, i32, i32) {
    %c0_i32 = arith.constant 0 : i32
    %c0_i32_0 = arith.constant 0 : i32
    %c0_i32_1 = arith.constant 0 : i32
    return %arg0, %c0_i32, %c0_i32_0 : i32, i32, i32
  }
  func.func @transform_6(%arg0: i32) -> (i32, i32, i32) {
    %c0_i32 = arith.constant 0 : i32
    %c0_i32_0 = arith.constant 0 : i32
    %c0_i32_1 = arith.constant 0 : i32
    return %arg0, %c0_i32, %c0_i32_0 : i32, i32, i32
  }
}

module attributes {stable_mosaic.version = 11 : i64} {
  func.func @_stage2_kernel(%arg0: i32, %arg1: memref<1x64x128xf32, #tpu.memory_space<vmem>>, %arg2: memref<1x64x128xf32, #tpu.memory_space<vmem>>, %arg3: memref<1x1x128xf32, #tpu.memory_space<vmem>>, %arg4: memref<8x128xf32, #tpu.memory_space<vmem>>, %arg5: memref<1x64x128xf32, #tpu.memory_space<vmem>>) attributes {dimension_semantics = [#tpu.dimension_semantics<parallel>], iteration_bounds = array<i64: 2>, scalar_prefetch = 0 : i64, scratch_operands = 0 : i64, tpu.core_type = #tpu.core_type<tc>, window_params = [{transform_indices = @transform_0, window_bounds = array<i64: 1, 64, 128>}, {transform_indices = @transform_1, window_bounds = array<i64: 1, 64, 128>}, {transform_indices = @transform_2, window_bounds = array<i64: 1, 1, 128>}, {pipeline_mode = #tpu.pipeline_mode<synchronous>, transform_indices = @transform_3, window_bounds = array<i64: 8, 128>}, {transform_indices = @transform_4, window_bounds = array<i64: 1, 64, 128>}]} {
    %c0 = arith.constant 0 : index
    %c0_0 = arith.constant 0 : index
    %c0_1 = arith.constant 0 : index
    %0 = vector.load %arg1[%c0, %c0_0, %c0_1] : memref<1x64x128xf32, #tpu.memory_space<vmem>>, vector<1x64x128xf32>
    %1 = vector.shape_cast %0 : vector<1x64x128xf32> to vector<64x128xf32>
    %c0_2 = arith.constant 0 : index
    %c0_3 = arith.constant 0 : index
    %2 = vector.load %arg4[%c0_2, %c0_3] : memref<8x128xf32, #tpu.memory_space<vmem>>, vector<1x128xf32>
    %3 = vector.broadcast %2 : vector<1x128xf32> to vector<64x128xf32>
    %4 = arith.mulf %1, %3 : vector<64x128xf32>
    %c0_4 = arith.constant 0 : index
    %c0_5 = arith.constant 0 : index
    %c0_6 = arith.constant 0 : index
    %5 = vector.load %arg2[%c0_4, %c0_5, %c0_6] : memref<1x64x128xf32, #tpu.memory_space<vmem>>, vector<1x64x128xf32>
    %6 = vector.shape_cast %5 : vector<1x64x128xf32> to vector<64x128xf32>
    %c1 = arith.constant 1 : index
    %c0_7 = arith.constant 0 : index
    %7 = vector.load %arg4[%c1, %c0_7] : memref<8x128xf32, #tpu.memory_space<vmem>>, vector<1x128xf32>
    %8 = vector.broadcast %7 : vector<1x128xf32> to vector<64x128xf32>
    %9 = arith.mulf %6, %8 : vector<64x128xf32>
    %10 = arith.addf %4, %9 : vector<64x128xf32>
    %c2 = arith.constant 2 : index
    %c0_8 = arith.constant 0 : index
    %11 = vector.load %arg4[%c2, %c0_8] : memref<8x128xf32, #tpu.memory_space<vmem>>, vector<1x128xf32>
    %12 = vector.broadcast %11 : vector<1x128xf32> to vector<64x128xf32>
    %13 = arith.addf %10, %12 : vector<64x128xf32>
    %c0_9 = arith.constant 0 : index
    %c0_10 = arith.constant 0 : index
    %c0_11 = arith.constant 0 : index
    %14 = vector.load %arg3[%c0_9, %c0_10, %c0_11] : memref<1x1x128xf32, #tpu.memory_space<vmem>>, vector<1x1x128xf32>
    %15 = vector.shape_cast %14 : vector<1x1x128xf32> to vector<1x128xf32>
    %16 = vector.broadcast %15 : vector<1x128xf32> to vector<64x128xf32>
    %17 = arith.mulf %13, %16 : vector<64x128xf32>
    %18 = arith.negf %17 : vector<64x128xf32>
    %19 = math.exp %18 : vector<64x128xf32>
    %cst = arith.constant 1.000000e+00 : f32
    %20 = vector.broadcast %cst : f32 to vector<64x128xf32>
    %21 = arith.addf %20, %19 : vector<64x128xf32>
    %22 = arith.divf %20, %21 : vector<64x128xf32>
    %23 = arith.mulf %17, %22 : vector<64x128xf32>
    %c0_12 = arith.constant 0 : index
    %c0_13 = arith.constant 0 : index
    %c0_14 = arith.constant 0 : index
    %24 = vector.load %arg5[%c0_12, %c0_13, %c0_14] : memref<1x64x128xf32, #tpu.memory_space<vmem>>, vector<1x64x128xf32>
    %25 = vector.shape_cast %24 : vector<1x64x128xf32> to vector<64x128xf32>
    %26 = vector.shape_cast %23 : vector<64x128xf32> to vector<1x64x128xf32>
    tpu.vector_store %arg5[%c0_12, %c0_13, %c0_14], %26 {strides = array<i32>} : memref<1x64x128xf32, #tpu.memory_space<vmem>>, vector<1x64x128xf32>,
    return
  }
  func.func @transform_0(%arg0: i32) -> (i32, i32, i32) {
    %c0_i32 = arith.constant 0 : i32
    %c0_i32_0 = arith.constant 0 : i32
    %c0_i32_1 = arith.constant 0 : i32
    return %arg0, %c0_i32, %c0_i32_0 : i32, i32, i32
  }
  func.func @transform_1(%arg0: i32) -> (i32, i32, i32) {
    %c0_i32 = arith.constant 0 : i32
    %c0_i32_0 = arith.constant 0 : i32
    %c0_i32_1 = arith.constant 0 : i32
    return %arg0, %c0_i32, %c0_i32_0 : i32, i32, i32
  }
  func.func @transform_2(%arg0: i32) -> (i32, i32, i32) {
    %c0_i32 = arith.constant 0 : i32
    %c0_i32_0 = arith.constant 0 : i32
    %c0_i32_1 = arith.constant 0 : i32
    return %arg0, %c0_i32, %c0_i32_0 : i32, i32, i32
  }
  func.func @transform_3(%arg0: i32) -> (i32, i32) {
    %c0_i32 = arith.constant 0 : i32
    %c0_i32_0 = arith.constant 0 : i32
    %c0_i32_1 = arith.constant 0 : i32
    return %c0_i32, %c0_i32_0 : i32, i32
  }
  func.func @transform_4(%arg0: i32) -> (i32, i32, i32) {
    %c0_i32 = arith.constant 0 : i32
    %c0_i32_0 = arith.constant 0 : i32
    %c0_i32_1 = arith.constant 0 : i32
    return %arg0, %c0_i32, %c0_i32_0 : i32, i32, i32
  }
}

</mosaic_0001>

<llo_original>
// kernel: downsample_forward.3
$region0: #{downsample_forward.3}
  #allocation0 [shape = 'u32[]', space=smem, size = 0x4, offset = 0x4, fixed_abs, tag = 'smem constant byte address 0x4 - core index']
  #allocation1 [shape = 'u32[144,128]{1,0:T(1,128)}', space=vmem, size = 0x12000, scoped, tag = 'internal scratch']
  %s0 = inlined_call_operand.vmem [shape: f32[2,64,128], index: 0, kind: input, shape index: {}]
  %s1 = inlined_call_operand.vmem [shape: f32[2,64,128], index: 1, kind: input, shape index: {}]
  %s2 = inlined_call_operand.vmem [shape: f32[2,1,128], index: 2, kind: input, shape index: {}]
  %s3 = inlined_call_operand.vmem [shape: f32[8,128], index: 3, kind: input, shape index: {}]
  %s4 = inlined_call_operand.vmem [shape: f32[2,64,128], index: 4, kind: output, shape index: {}]
  %s5 = sld [smem:[#allocation0]]
  $region49: #{downsample_forward.3} parent=0
    _
  %s7 = ssub.s32 1, %s5
  %s8 = scalar_select 0, %s7, %s5
  loop: start=0, step=1, limit=4
  $region2: #{downsample_forward.3} parent=0 // loop_pre_header
    _
  $region3: #{downsample_forward.3} parent=0 // loop_header
    %s10 = sphi 0, %s14
    %p11 = scmp.ge.s32.totalorder %s10, 4
    %s20 = sphi 0, %s22
    %s23 = sphi 0, %s20
    %s24 = sphi 0, %s23
    %s40 = sphi 0, %s24
    %s46 = sphi 0, %s48
    %s49 = sphi 0, %s46
    %s50 = sphi 0, %s49
    %s66 = sphi 0, %s50
    %s72 = sphi 0, %s74
    %s75 = sphi 0, %s72
    %s76 = sphi 0, %s75
    %s92 = sphi 0, %s76
    %s96 = sphi 0, %s96
    %s98 = sphi 0, %s96
    %s99 = sphi 0, %s98
    %s113 = sphi 0, %s99
    %s119 = sphi 0, %s121
    %s122 = sphi 0, %s119
    %s123 = sphi 0, %s122
    %s139 = sphi 0, %s123
  $region4: #{downsample_forward.3} parent=0 // loop_header_branch
    %13 = sbr.rel (%p11) target = $region8
  $region5: #{downsample_forward.3} parent=0 // loop_body
    %s15 = ssub.s32 %s10, 1
    %s16 = ssub.s32 %s10, 2
    %s17 = sadd.s32 %s10, 1
    %s18 = ssub.s32 %s10, %s17
    %p19 = scmp.eq.s32.totalorder %s18, 0
    %s21 = sadd.s32 %s20, 1
    %s22 = scalar_select %p19, %s20, %s21
    %p25 = pneg %p19
    %p26 = scmp.eq.s32.totalorder %s10, 1
    %p27 = por %p25, %p26
    %p28 = scmp.ne.s32.totalorder %s20, %s23
    %p29 = scmp.eq.s32.totalorder %s10, 0
    %p30 = por %p28, %p29
    %p31 = scmp.ne.s32.totalorder %s20, %s23
    %p32 = scmp.eq.s32.totalorder %s15, 1
    %p33 = por %p31, %p32
    %p34 = scmp.ne.s32.totalorder %s23, %s24
    %p35 = scmp.eq.s32.totalorder %s15, 0
    %p36 = por %p34, %p35
    %p37 = scmp.ne.s32.totalorder %s23, %s24
    %p38 = scmp.eq.s32.totalorder %s16, 1
    %p39 = por %p37, %p38
    %p41 = scmp.ne.s32.totalorder %s24, %s40
    %p42 = scmp.eq.s32.totalorder %s16, 0
    %p43 = por %p41, %p42
    %s44 = ssub.s32 %s10, %s17
    %p45 = scmp.eq.s32.totalorder %s44, 0
    %s47 = sadd.s32 %s46, 1
    %s48 = scalar_select %p45, %s46, %s47
    %p51 = pneg %p45
    %p52 = scmp.eq.s32.totalorder %s10, 1
    %p53 = por %p51, %p52
    %p54 = scmp.ne.s32.totalorder %s46, %s49
    %p55 = scmp.eq.s32.totalorder %s10, 0
    %p56 = por %p54, %p55
    %p57 = scmp.ne.s32.totalorder %s46, %s49
    %p58 = scmp.eq.s32.totalorder %s15, 1
    %p59 = por %p57, %p58
    %p60 = scmp.ne.s32.totalorder %s49, %s50
    %p61 = scmp.eq.s32.totalorder %s15, 0
    %p62 = por %p60, %p61
    %p63 = scmp.ne.s32.totalorder %s49, %s50
    %p64 = scmp.eq.s32.totalorder %s16, 1
    %p65 = por %p63, %p64
    %p67 = scmp.ne.s32.totalorder %s50, %s66
    %p68 = scmp.eq.s32.totalorder %s16, 0
    %p69 = por %p67, %p68
    %s70 = ssub.s32 %s10, %s17
    %p71 = scmp.eq.s32.totalorder %s70, 0
    %s73 = sadd.s32 %s72, 1
    %s74 = scalar_select %p71, %s72, %s73
    %p77 = pneg %p71
    %p78 = scmp.eq.s32.totalorder %s10, 1
    %p79 = por %p77, %p78
    %p80 = scmp.ne.s32.totalorder %s72, %s75
    %p81 = scmp.eq.s32.totalorder %s10, 0
    %p82 = por %p80, %p81
    %p83 = scmp.ne.s32.totalorder %s72, %s75
    %p84 = scmp.eq.s32.totalorder %s15, 1
    %p85 = por %p83, %p84
    %p86 = scmp.ne.s32.totalorder %s75, %s76
    %p87 = scmp.eq.s32.totalorder %s15, 0
    %p88 = por %p86, %p87
    %p89 = scmp.ne.s32.totalorder %s75, %s76
    %p90 = scmp.eq.s32.totalorder %s16, 1
    %p91 = por %p89, %p90
    %p93 = scmp.ne.s32.totalorder %s76, %s92
    %p94 = scmp.eq.s32.totalorder %s16, 0
    %p95 = por %p93, %p94
    %s97 = sadd.s32 %s96, 1
    %p100 = scmp.eq.s32.totalorder %s10, 1
    %p101 = scmp.ne.s32.totalorder %s96, %s98
    %p102 = scmp.eq.s32.totalorder %s10, 0
    %p103 = por %p101, %p102
    %p104 = scmp.ne.s32.totalorder %s96, %s98
    %p105 = scmp.eq.s32.totalorder %s15, 1
    %p106 = por %p104, %p105
    %p107 = scmp.ne.s32.totalorder %s98, %s99
    %p108 = scmp.eq.s32.totalorder %s15, 0
    %p109 = por %p107, %p108
    %p110 = scmp.ne.s32.totalorder %s98, %s99
    %p111 = scmp.eq.s32.totalorder %s16, 1
    %p112 = por %p110, %p111
    %p114 = scmp.ne.s32.totalorder %s99, %s113
    %p115 = scmp.eq.s32.totalorder %s16, 0
    %p116 = por %p114, %p115
    %s117 = ssub.s32 %s10, %s17
    %p118 = scmp.eq.s32.totalorder %s117, 0
    %s120 = sadd.s32 %s119, 1
    %s121 = scalar_select %p118, %s119, %s120
    %p124 = pneg %p118
    %p125 = scmp.eq.s32.totalorder %s10, 1
    %p126 = por %p124, %p125
    %p127 = scmp.ne.s32.totalorder %s119, %s122
    %p128 = scmp.eq.s32.totalorder %s10, 0
    %p129 = por %p127, %p128
    %p130 = scmp.ne.s32.totalorder %s119, %s122
    %p131 = scmp.eq.s32.totalorder %s15, 1
    %p132 = por %p130, %p131
    %p133 = scmp.ne.s32.totalorder %s122, %s123
    %p134 = scmp.eq.s32.totalorder %s15, 0
    %p135 = por %p133, %p134
    %p136 = scmp.ne.s32.totalorder %s122, %s123
    %p137 = scmp.eq.s32.totalorder %s16, 1
    %p138 = por %p136, %p137
    %p140 = scmp.ne.s32.totalorder %s123, %s139
    %p141 = scmp.eq.s32.totalorder %s16, 0
    %p142 = por %p140, %p141
    %p143 = scmp.le.s32.totalorder 1, %s10
    %p144 = scmp.lt.s32.totalorder %s10, 3
    %p145 = pnand %p143, %p144
    %p146 = pneg %p145
    // Predicated region
    $region9: #{downsample_forward.3} parent=5 // pred_check
      _
    $region10: #{downsample_forward.3} parent=5 // pred_check_branch
      %148 = sbr.rel (%p145) target = $region12
    $region11: #{downsample_forward.3} parent=5 // pred_region
      %s149 = ssub.s32 %s10, 1
      // Predicated region
      $region13: #{downsample_forward.3} parent=11 // pred_check
        %p150 = pneg %p109
      $region14: #{downsample_forward.3} parent=11 // pred_check_branch
        %152 = sbr.rel (%p150) target = $region16
      $region15: #{downsample_forward.3} parent=11 // pred_region
        _
      $region16: #{downsample_forward.3} parent=11 // pred_fallthru
        _
    $region12: #{downsample_forward.3} parent=5 // pred_fallthru
      _
    %p153 = scmp.lt.s32.totalorder %s10, 2
    // Predicated region
    $region17: #{downsample_forward.3} parent=5 // pred_check
      %p154 = pneg %p153
    $region18: #{downsample_forward.3} parent=5 // pred_check_branch
      %156 = sbr.rel (%p154) target = $region20
    $region19: #{downsample_forward.3} parent=5 // pred_region
      // Predicated region
      $region21: #{downsample_forward.3} parent=19 // pred_check
        %p157 = pneg %p30
      $region22: #{downsample_forward.3} parent=19 // pred_check_branch
        %159 = sbr.rel (%p157) target = $region24
      $region23: #{downsample_forward.3} parent=19 // pred_region
        %p160 = scmp.lt.s32.totalorder %s10, 1
        %s161 = scalar_select %p160, %s10, 1
        %s162 = smul.addr %s161, 8
        %s163 = smul.addr %s162, 8
        %s164 = scalar_lea.vmem %s0, %s163
      $region24: #{downsample_forward.3} parent=19 // pred_fallthru
        _
      // Predicated region
      $region25: #{downsample_forward.3} parent=19 // pred_check
        %p165 = pneg %p56
      $region26: #{downsample_forward.3} parent=19 // pred_check_branch
        %167 = sbr.rel (%p165) target = $region28
      $region27: #{downsample_forward.3} parent=19 // pred_region
        %p168 = scmp.lt.s32.totalorder %s10, 1
        %s169 = scalar_select %p168, %s10, 1
        %s170 = smul.addr %s169, 8
        %s171 = smul.addr %s170, 8
        %s172 = scalar_lea.vmem %s1, %s171
      $region28: #{downsample_forward.3} parent=19 // pred_fallthru
        _
      // Predicated region
      $region29: #{downsample_forward.3} parent=19 // pred_check
        %p173 = pneg %p82
      $region30: #{downsample_forward.3} parent=19 // pred_check_branch
        %175 = sbr.rel (%p173) target = $region32
      $region31: #{downsample_forward.3} parent=19 // pred_region
        %p176 = scmp.lt.s32.totalorder %s10, 1
        %s177 = scalar_select %p176, %s10, 1
        %s178 = scalar_lea.vmem %s2, %s177
      $region32: #{downsample_forward.3} parent=19 // pred_fallthru
        _
    $region20: #{downsample_forward.3} parent=5 // pred_fallthru
      _
    %p179 = scmp.le.s32.totalorder 1, %s10
    %p180 = scmp.lt.s32.totalorder %s10, 3
    %p181 = pnand %p179, %p180
    %p182 = pneg %p181
    // Predicated region
    $region33: #{downsample_forward.3} parent=5 // pred_check
      _
    $region34: #{downsample_forward.3} parent=5 // pred_check_branch
      %184 = sbr.rel (%p181) target = $region36
    $region35: #{downsample_forward.3} parent=5 // pred_region
      %s185 = ssub.s32 %s10, 1
      %p186 = scmp.lt.s32.totalorder %s15, 1
      %s187 = scalar_select %p186, %s15, 1
      %s188 = smul.addr %s187, 8
      %s189 = smul.addr %s188, 8
      %s190 = scalar_lea.vmem %s0, %s189
      %p191 = pneg %p36
      %p192 = pneg %p33
      %p193 = scmp.lt.s32.totalorder %s15, 1
      %s194 = scalar_select %p193, %s15, 1
      %s195 = smul.addr %s194, 8
      %s196 = smul.addr %s195, 8
      %s197 = scalar_lea.vmem %s1, %s196
      %p198 = pneg %p62
      %p199 = pneg %p59
      %p200 = scmp.lt.s32.totalorder %s15, 1
      %s201 = scalar_select %p200, %s15, 1
      %s202 = scalar_lea.vmem %s2, %s201
      %p203 = pneg %p88
      %p204 = pneg %p85
      %p205 = pneg %p109
      %p206 = pneg %p106
      %p207 = pneg %p135
      %p208 = pneg %p132
      %p209 = scmp.lt.s32.totalorder %s15, 1
      %s210 = scalar_select %p209, %s15, 1
      %s211 = smul.addr %s210, 8
      %s212 = smul.addr %s211, 8
      %s213 = scalar_lea.vmem %s4, %s212
      %p214 = scmp.lt.s32.totalorder %s15, 1
      %s215 = scalar_select %p214, %s15, 1
      %s216 = smul.addr %s215, 8
      %s217 = smul.addr %s216, 8
      %s218 = scalar_lea.vmem %s0, %s217
      %p219 = scmp.lt.s32.totalorder %s15, 1
      %s220 = scalar_select %p219, %s15, 1
      %s221 = smul.addr %s220, 8
      %s222 = smul.addr %s221, 8
      %s223 = scalar_lea.vmem %s1, %s222
      %p224 = scmp.lt.s32.totalorder %s15, 1
      %s225 = scalar_select %p224, %s15, 1
      %s226 = scalar_lea.vmem %s2, %s225
      %p227 = scmp.lt.s32.totalorder %s15, 1
      %s228 = scalar_select %p227, %s15, 1
      %s229 = smul.addr %s228, 8
      %s230 = smul.addr %s229, 8
      %s231 = scalar_lea.vmem %s4, %s230
      %v232 = vld [vmem:[%s218] sm:$0xff]
      %v233 = vld [vmem:[%s218 + $0x8] sm:$0xff]
      %v234 = vld [vmem:[%s218 + $0x10] sm:$0xff]
      %v235 = vld [vmem:[%s218 + $0x18] sm:$0xff]
      %v236 = vld [vmem:[%s218 + $0x20] sm:$0xff]
      %v237 = vld [vmem:[%s218 + $0x28] sm:$0xff]
      %v238 = vld [vmem:[%s218 + $0x30] sm:$0xff]
      %v239 = vld [vmem:[%s218 + $0x38] sm:$0xff]
      %v240 = vld [vmem:[%s3] sm:$0x1]
      %v241 = vlaneseq
      %v242 = vshrl.u32 %v241, 7
      %v243 = vsub.s32 0, %v242
      %v244 = vrot.slane %v240, %v243
      %v245 = vmul.f32 %v232, %v244
      %v246 = vmul.f32 %v233, %v244
      %v247 = vmul.f32 %v234, %v244
      %v248 = vmul.f32 %v235, %v244
      %v249 = vmul.f32 %v236, %v244
      %v250 = vmul.f32 %v237, %v244
      %v251 = vmul.f32 %v238, %v244
      %v252 = vmul.f32 %v239, %v244
      %v253 = vld [vmem:[%s223] sm:$0xff]
      %v254 = vld [vmem:[%s223 + $0x8] sm:$0xff]
      %v255 = vld [vmem:[%s223 + $0x10] sm:$0xff]
      %v256 = vld [vmem:[%s223 + $0x18] sm:$0xff]
      %v257 = vld [vmem:[%s223 + $0x20] sm:$0xff]
      %v258 = vld [vmem:[%s223 + $0x28] sm:$0xff]
      %v259 = vld [vmem:[%s223 + $0x30] sm:$0xff]
      %v260 = vld [vmem:[%s223 + $0x38] sm:$0xff]
      %v261 = vld [vmem:[%s3 + $0x1] sm:$0x1]
      %v262 = vlaneseq
      %v263 = vshrl.u32 %v262, 7
      %v264 = vsub.s32 0, %v263
      %v265 = vrot.slane %v261, %v264
      %v266 = vmul.f32 %v253, %v265
      %v267 = vmul.f32 %v254, %v265
      %v268 = vmul.f32 %v255, %v265
      %v269 = vmul.f32 %v256, %v265
      %v270 = vmul.f32 %v257, %v265
      %v271 = vmul.f32 %v258, %v265
      %v272 = vmul.f32 %v259, %v265
      %v273 = vmul.f32 %v260, %v265
      %v274 = vadd.f32 %v245, %v266
      %v275 = vadd.f32 %v246, %v267
      %v276 = vadd.f32 %v247, %v268
      %v277 = vadd.f32 %v248, %v269
      %v278 = vadd.f32 %v249, %v270
      %v279 = vadd.f32 %v250, %v271
      %v280 = vadd.f32 %v251, %v272
      %v281 = vadd.f32 %v252, %v273
      %v282 = vld [vmem:[%s3 + $0x2] sm:$0x1]
      %v283 = vlaneseq
      %v284 = vshrl.u32 %v283, 7
      %v285 = vsub.s32 0, %v284
      %v286 = vrot.slane %v282, %v285
      %v287 = vadd.f32 %v274, %v286
      %v288 = vadd.f32 %v275, %v286
      %v289 = vadd.f32 %v276, %v286
      %v290 = vadd.f32 %v277, %v286
      %v291 = vadd.f32 %v278, %v286
      %v292 = vadd.f32 %v279, %v286
      %v293 = vadd.f32 %v280, %v286
      %v294 = vadd.f32 %v281, %v286
      %v295 = vld [vmem:[%s226] sm:$0x1]
      %v297 = vlaneseq
      %v298 = vshrl.u32 %v297, 7
      %v299 = vsub.s32 0, %v298
      %v300 = vrot.slane %v295, %v299
      %v302 = vmul.f32 %v287, %v300
      %v303 = vmul.f32 %v288, %v300
      %v304 = vmul.f32 %v289, %v300
      %v305 = vmul.f32 %v290, %v300
      %v306 = vmul.f32 %v291, %v300
      %v307 = vmul.f32 %v292, %v300
      %v308 = vmul.f32 %v293, %v300
      %v309 = vmul.f32 %v294, %v300
      %v310 = vxor.u32 %v302, 2147483648
      %v311 = vxor.u32 %v303, 2147483648
      %v312 = vxor.u32 %v304, 2147483648
      %v313 = vxor.u32 %v305, 2147483648
      %v314 = vxor.u32 %v306, 2147483648
      %v315 = vxor.u32 %v307, 2147483648
      %v316 = vxor.u32 %v308, 2147483648
      %v317 = vxor.u32 %v309, 2147483648
      %v318 = vmul.f32 %v310, 1.442695
      %v319 = vpow.pop %v318
      %v320 = vmul.f32 %v311, 1.442695
      %v321 = vpow.pop %v320
      %v322 = vmul.f32 %v312, 1.442695
      %v323 = vpow.pop %v322
      %v324 = vmul.f32 %v313, 1.442695
      %v325 = vpow.pop %v324
      %v326 = vmul.f32 %v314, 1.442695
      %v327 = vpow.pop %v326
      %v328 = vmul.f32 %v315, 1.442695
      %v329 = vpow.pop %v328
      %v330 = vmul.f32 %v316, 1.442695
      %v331 = vpow.pop %v330
      %v332 = vmul.f32 %v317, 1.442695
      %v333 = vpow.pop %v332
      %v334 = vadd.f32 %v319, 1.0
      %v335 = vadd.f32 %v321, 1.0
      %v336 = vadd.f32 %v323, 1.0
      %v337 = vadd.f32 %v325, 1.0
      %v338 = vadd.f32 %v327, 1.0
      %v339 = vadd.f32 %v329, 1.0
      %v340 = vadd.f32 %v331, 1.0
      %v341 = vadd.f32 %v333, 1.0
      %v342 = vrcp.pop %v334
      %v343 = vmul.f32 1.0, %v342
      %v344 = vrcp.pop %v335
      %v345 = vmul.f32 1.0, %v344
      %v346 = vrcp.pop %v336
      %v347 = vmul.f32 1.0, %v346
      %v348 = vrcp.pop %v337
      %v349 = vmul.f32 1.0, %v348
      %v350 = vrcp.pop %v338
      %v351 = vmul.f32 1.0, %v350
      %v352 = vrcp.pop %v339
      %v353 = vmul.f32 1.0, %v352
      %v354 = vrcp.pop %v340
      %v355 = vmul.f32 1.0, %v354
      %v356 = vrcp.pop %v341
      %v357 = vmul.f32 1.0, %v356
      %v358 = vmul.f32 %v302, %v343
      %v359 = vmul.f32 %v303, %v345
      %v360 = vmul.f32 %v304, %v347
      %v361 = vmul.f32 %v305, %v349
      %v362 = vmul.f32 %v306, %v351
      %v363 = vmul.f32 %v307, %v353
      %v364 = vmul.f32 %v308, %v355
      %v365 = vmul.f32 %v309, %v357
      %366 = vst [vmem:[%s231] sm:$0xff] %v358
      %367 = vst [vmem:[%s231 + $0x8] sm:$0xff] %v359
      %368 = vst [vmem:[%s231 + $0x10] sm:$0xff] %v360
      %369 = vst [vmem:[%s231 + $0x18] sm:$0xff] %v361
      %370 = vst [vmem:[%s231 + $0x20] sm:$0xff] %v362
      %371 = vst [vmem:[%s231 + $0x28] sm:$0xff] %v363
      %372 = vst [vmem:[%s231 + $0x30] sm:$0xff] %v364
      %373 = vst [vmem:[%s231 + $0x38] sm:$0xff] %v365
      %p374 = scmp.lt.s32.totalorder %s15, 1
      %s375 = scalar_select %p374, %s15, 1
      %s376 = smul.addr %s375, 8
      %s377 = smul.addr %s376, 8
      %s378 = scalar_lea.vmem %s4, %s377
      // Predicated region
      $region37: #{downsample_forward.3} parent=35 // pred_check
        %p379 = pneg %p132
      $region38: #{downsample_forward.3} parent=35 // pred_check_branch
        %381 = sbr.rel (%p379) target = $region40
      $region39: #{downsample_forward.3} parent=35 // pred_region
        _
      $region40: #{downsample_forward.3} parent=35 // pred_fallthru
        _
    $region36: #{downsample_forward.3} parent=5 // pred_fallthru
      _
    %p382 = scmp.le.s32.totalorder 2, %s10
    // Predicated region
    $region41: #{downsample_forward.3} parent=5 // pred_check
      %p383 = pneg %p382
    $region42: #{downsample_forward.3} parent=5 // pred_check_branch
      %385 = sbr.rel (%p383) target = $region44
    $region43: #{downsample_forward.3} parent=5 // pred_region
      %s386 = ssub.s32 %s10, 2
      // Predicated region
      $region45: #{downsample_forward.3} parent=43 // pred_check
        %p387 = pneg %p138
      $region46: #{downsample_forward.3} parent=43 // pred_check_branch
        %389 = sbr.rel (%p387) target = $region48
      $region47: #{downsample_forward.3} parent=43 // pred_region
        %p390 = scmp.lt.s32.totalorder %s16, 1
        %s391 = scalar_select %p390, %s16, 1
        %s392 = smul.addr %s391, 8
        %s393 = smul.addr %s392, 8
        %s394 = scalar_lea.vmem %s4, %s393
      $region48: #{downsample_forward.3} parent=43 // pred_fallthru
        _
    $region44: #{downsample_forward.3} parent=5 // pred_fallthru
      _
  $region6: #{downsample_forward.3} parent=0 // loop_footer
    %s14 = sadd.s32 1, %s10
  $region7: #{downsample_forward.3} parent=0 // loop_footer_branch
    %9 = sbr.rel target = $region3
  $region8: #{downsample_forward.3} parent=0 // loop_exit
    _

// kernel: downsample_forward.2
$region0: #{downsample_forward.2}
  #allocation0 [shape = 'u32[]', space=smem, size = 0x4, offset = 0x4, fixed_abs, tag = 'smem constant byte address 0x4 - core index']
  #allocation1 [shape = 'u32[144,128]{1,0:T(1,128)}', space=vmem, size = 0x12000, scoped, tag = 'internal scratch']
  %s0 = inlined_call_operand.vmem [shape: f32[2,18,18,128], index: 0, kind: input, shape index: {}]
  %s1 = inlined_call_operand.vmem [shape: bf16[128,128], index: 1, kind: input, shape index: {}]
  %s2 = inlined_call_operand.vmem [shape: bf16[1152,128], index: 2, kind: input, shape index: {}]
  %s3 = inlined_call_operand.vmem [shape: bf16[128,128], index: 3, kind: input, shape index: {}]
  %s4 = inlined_call_operand.vmem [shape: f32[2,64,128], index: 4, kind: output, shape index: {0}]
  %s5 = inlined_call_operand.vmem [shape: f32[2,64,128], index: 5, kind: output, shape index: {1}]
  %s6 = inlined_call_operand.vmem [shape: f32[2,8,128], index: 6, kind: output, shape index: {2}]
  %7 = xla_tuple %s4, %s5, %s6
  %s8 = sld [smem:[#allocation0]]
  $region65: #{downsample_forward.2} parent=0
    _
  %s10 = ssub.s32 1, %s8
  %s11 = scalar_select 0, %s10, %s8
  loop: start=0, step=1, limit=4
  $region2: #{downsample_forward.2} parent=0 // loop_pre_header
    _
  $region3: #{downsample_forward.2} parent=0 // loop_header
    %s13 = sphi 0, %s17
    %p14 = scmp.ge.s32.totalorder %s13, 4
    %s23 = sphi 0, %s25
    %s26 = sphi 0, %s23
    %s27 = sphi 0, %s26
    %s43 = sphi 0, %s27
    %s47 = sphi 0, %s47
    %s49 = sphi 0, %s47
    %s50 = sphi 0, %s49
    %s64 = sphi 0, %s50
    %s68 = sphi 0, %s68
    %s70 = sphi 0, %s68
    %s71 = sphi 0, %s70
    %s85 = sphi 0, %s71
    %s89 = sphi 0, %s89
    %s91 = sphi 0, %s89
    %s92 = sphi 0, %s91
    %s106 = sphi 0, %s92
    %s112 = sphi 0, %s114
    %s115 = sphi 0, %s112
    %s116 = sphi 0, %s115
    %s132 = sphi 0, %s116
    %s138 = sphi 0, %s140
    %s141 = sphi 0, %s138
    %s142 = sphi 0, %s141
    %s158 = sphi 0, %s142
    %s164 = sphi 0, %s166
    %s167 = sphi 0, %s164
    %s168 = sphi 0, %s167
    %s184 = sphi 0, %s168
  $region4: #{downsample_forward.2} parent=0 // loop_header_branch
    %16 = sbr.rel (%p14) target = $region8
  $region5: #{downsample_forward.2} parent=0 // loop_body
    %s18 = ssub.s32 %s13, 1
    %s19 = ssub.s32 %s13, 2
    %s20 = sadd.s32 %s13, 1
    %s21 = ssub.s32 %s13, %s20
    %p22 = scmp.eq.s32.totalorder %s21, 0
    %s24 = sadd.s32 %s23, 1
    %s25 = scalar_select %p22, %s23, %s24
    %p28 = pneg %p22
    %p29 = scmp.eq.s32.totalorder %s13, 1
    %p30 = por %p28, %p29
    %p31 = scmp.ne.s32.totalorder %s23, %s26
    %p32 = scmp.eq.s32.totalorder %s13, 0
    %p33 = por %p31, %p32
    %p34 = scmp.ne.s32.totalorder %s23, %s26
    %p35 = scmp.eq.s32.totalorder %s18, 1
    %p36 = por %p34, %p35
    %p37 = scmp.ne.s32.totalorder %s26, %s27
    %p38 = scmp.eq.s32.totalorder %s18, 0
    %p39 = por %p37, %p38
    %p40 = scmp.ne.s32.totalorder %s26, %s27
    %p41 = scmp.eq.s32.totalorder %s19, 1
    %p42 = por %p40, %p41
    %p44 = scmp.ne.s32.totalorder %s27, %s43
    %p45 = scmp.eq.s32.totalorder %s19, 0
    %p46 = por %p44, %p45
    %s48 = sadd.s32 %s47, 1
    %p51 = scmp.eq.s32.totalorder %s13, 1
    %p52 = scmp.ne.s32.totalorder %s47, %s49
    %p53 = scmp.eq.s32.totalorder %s13, 0
    %p54 = por %p52, %p53
    %p55 = scmp.ne.s32.totalorder %s47, %s49
    %p56 = scmp.eq.s32.totalorder %s18, 1
    %p57 = por %p55, %p56
    %p58 = scmp.ne.s32.totalorder %s49, %s50
    %p59 = scmp.eq.s32.totalorder %s18, 0
    %p60 = por %p58, %p59
    %p61 = scmp.ne.s32.totalorder %s49, %s50
    %p62 = scmp.eq.s32.totalorder %s19, 1
    %p63 = por %p61, %p62
    %p65 = scmp.ne.s32.totalorder %s50, %s64
    %p66 = scmp.eq.s32.totalorder %s19, 0
    %p67 = por %p65, %p66
    %s69 = sadd.s32 %s68, 1
    %p72 = scmp.eq.s32.totalorder %s13, 1
    %p73 = scmp.ne.s32.totalorder %s68, %s70
    %p74 = scmp.eq.s32.totalorder %s13, 0
    %p75 = por %p73, %p74
    %p76 = scmp.ne.s32.totalorder %s68, %s70
    %p77 = scmp.eq.s32.totalorder %s18, 1
    %p78 = por %p76, %p77
    %p79 = scmp.ne.s32.totalorder %s70, %s71
    %p80 = scmp.eq.s32.totalorder %s18, 0
    %p81 = por %p79, %p80
    %p82 = scmp.ne.s32.totalorder %s70, %s71
    %p83 = scmp.eq.s32.totalorder %s19, 1
    %p84 = por %p82, %p83
    %p86 = scmp.ne.s32.totalorder %s71, %s85
    %p87 = scmp.eq.s32.totalorder %s19, 0
    %p88 = por %p86, %p87
    %s90 = sadd.s32 %s89, 1
    %p93 = scmp.eq.s32.totalorder %s13, 1
    %p94 = scmp.ne.s32.totalorder %s89, %s91
    %p95 = scmp.eq.s32.totalorder %s13, 0
    %p96 = por %p94, %p95
    %p97 = scmp.ne.s32.totalorder %s89, %s91
    %p98 = scmp.eq.s32.totalorder %s18, 1
    %p99 = por %p97, %p98
    %p100 = scmp.ne.s32.totalorder %s91, %s92
    %p101 = scmp.eq.s32.totalorder %s18, 0
    %p102 = por %p100, %p101
    %p103 = scmp.ne.s32.totalorder %s91, %s92
    %p104 = scmp.eq.s32.totalorder %s19, 1
    %p105 = por %p103, %p104
    %p107 = scmp.ne.s32.totalorder %s92, %s106
    %p108 = scmp.eq.s32.totalorder %s19, 0
    %p109 = por %p107, %p108
    %s110 = ssub.s32 %s13, %s20
    %p111 = scmp.eq.s32.totalorder %s110, 0
    %s113 = sadd.s32 %s112, 1
    %s114 = scalar_select %p111, %s112, %s113
    %p117 = pneg %p111
    %p118 = scmp.eq.s32.totalorder %s13, 1
    %p119 = por %p117, %p118
    %p120 = scmp.ne.s32.totalorder %s112, %s115
    %p121 = scmp.eq.s32.totalorder %s13, 0
    %p122 = por %p120, %p121
    %p123 = scmp.ne.s32.totalorder %s112, %s115
    %p124 = scmp.eq.s32.totalorder %s18, 1
    %p125 = por %p123, %p124
    %p126 = scmp.ne.s32.totalorder %s115, %s116
    %p127 = scmp.eq.s32.totalorder %s18, 0
    %p128 = por %p126, %p127
    %p129 = scmp.ne.s32.totalorder %s115, %s116
    %p130 = scmp.eq.s32.totalorder %s19, 1
    %p131 = por %p129, %p130
    %p133 = scmp.ne.s32.totalorder %s116, %s132
    %p134 = scmp.eq.s32.totalorder %s19, 0
    %p135 = por %p133, %p134
    %s136 = ssub.s32 %s13, %s20
    %p137 = scmp.eq.s32.totalorder %s136, 0
    %s139 = sadd.s32 %s138, 1
    %s140 = scalar_select %p137, %s138, %s139
    %p143 = pneg %p137
    %p144 = scmp.eq.s32.totalorder %s13, 1
    %p145 = por %p143, %p144
    %p146 = scmp.ne.s32.totalorder %s138, %s141
    %p147 = scmp.eq.s32.totalorder %s13, 0
    %p148 = por %p146, %p147
    %p149 = scmp.ne.s32.totalorder %s138, %s141
    %p150 = scmp.eq.s32.totalorder %s18, 1
    %p151 = por %p149, %p150
    %p152 = scmp.ne.s32.totalorder %s141, %s142
    %p153 = scmp.eq.s32.totalorder %s18, 0
    %p154 = por %p152, %p153
    %p155 = scmp.ne.s32.totalorder %s141, %s142
    %p156 = scmp.eq.s32.totalorder %s19, 1
    %p157 = por %p155, %p156
    %p159 = scmp.ne.s32.totalorder %s142, %s158
    %p160 = scmp.eq.s32.totalorder %s19, 0
    %p161 = por %p159, %p160
    %s162 = ssub.s32 %s13, %s20
    %p163 = scmp.eq.s32.totalorder %s162, 0
    %s165 = sadd.s32 %s164, 1
    %s166 = scalar_select %p163, %s164, %s165
    %p169 = pneg %p163
    %p170 = scmp.eq.s32.totalorder %s13, 1
    %p171 = por %p169, %p170
    %p172 = scmp.ne.s32.totalorder %s164, %s167
    %p173 = scmp.eq.s32.totalorder %s13, 0
    %p174 = por %p172, %p173
    %p175 = scmp.ne.s32.totalorder %s164, %s167
    %p176 = scmp.eq.s32.totalorder %s18, 1
    %p177 = por %p175, %p176
    %p178 = scmp.ne.s32.totalorder %s167, %s168
    %p179 = scmp.eq.s32.totalorder %s18, 0
    %p180 = por %p178, %p179
    %p181 = scmp.ne.s32.totalorder %s167, %s168
    %p182 = scmp.eq.s32.totalorder %s19, 1
    %p183 = por %p181, %p182
    %p185 = scmp.ne.s32.totalorder %s168, %s184
    %p186 = scmp.eq.s32.totalorder %s19, 0
    %p187 = por %p185, %p186
    %p188 = scmp.le.s32.totalorder 1, %s13
    %p189 = scmp.lt.s32.totalorder %s13, 3
    %p190 = pnand %p188, %p189
    %p191 = pneg %p190
    // Predicated region
    $region9: #{downsample_forward.2} parent=5 // pred_check
      _
    $region10: #{downsample_forward.2} parent=5 // pred_check_branch
      %193 = sbr.rel (%p190) target = $region12
    $region11: #{downsample_forward.2} parent=5 // pred_region
      %s194 = ssub.s32 %s13, 1
      // Predicated region
      $region13: #{downsample_forward.2} parent=11 // pred_check
        %p195 = pneg %p60
      $region14: #{downsample_forward.2} parent=11 // pred_check_branch
        %197 = sbr.rel (%p195) target = $region16
      $region15: #{downsample_forward.2} parent=11 // pred_region
        _
      $region16: #{downsample_forward.2} parent=11 // pred_fallthru
        _
      // Predicated region
      $region17: #{downsample_forward.2} parent=11 // pred_check
        %p198 = pneg %p81
      $region18: #{downsample_forward.2} parent=11 // pred_check_branch
        %200 = sbr.rel (%p198) target = $region20
      $region19: #{downsample_forward.2} parent=11 // pred_region
        _
      $region20: #{downsample_forward.2} parent=11 // pred_fallthru
        _
      // Predicated region
      $region21: #{downsample_forward.2} parent=11 // pred_check
        %p201 = pneg %p102
      $region22: #{downsample_forward.2} parent=11 // pred_check_branch
        %203 = sbr.rel (%p201) target = $region24
      $region23: #{downsample_forward.2} parent=11 // pred_region
        _
      $region24: #{downsample_forward.2} parent=11 // pred_fallthru
        _
    $region12: #{downsample_forward.2} parent=5 // pred_fallthru
      _
    %p204 = scmp.lt.s32.totalorder %s13, 2
    // Predicated region
    $region25: #{downsample_forward.2} parent=5 // pred_check
      %p205 = pneg %p204
    $region26: #{downsample_forward.2} parent=5 // pred_check_branch
      %207 = sbr.rel (%p205) target = $region28
    $region27: #{downsample_forward.2} parent=5 // pred_region
      // Predicated region
      $region29: #{downsample_forward.2} parent=27 // pred_check
        %p208 = pneg %p33
      $region30: #{downsample_forward.2} parent=27 // pred_check_branch
        %210 = sbr.rel (%p208) target = $region32
      $region31: #{downsample_forward.2} parent=27 // pred_region
        %p211 = scmp.lt.s32.totalorder %s13, 1
        %s212 = scalar_select %p211, %s13, 1
        %s213 = smul.addr %s212, 54
        %s214 = smul.addr %s213, 8
        %s215 = scalar_lea.vmem %s0, %s214
      $region32: #{downsample_forward.2} parent=27 // pred_fallthru
        _
    $region28: #{downsample_forward.2} parent=5 // pred_fallthru
      _
    %p216 = scmp.le.s32.totalorder 1, %s13
    %p217 = scmp.lt.s32.totalorder %s13, 3
    %p218 = pnand %p216, %p217
    %p219 = pneg %p218
    // Predicated region
    $region33: #{downsample_forward.2} parent=5 // pred_check
      _
    $region34: #{downsample_forward.2} parent=5 // pred_check_branch
      %221 = sbr.rel (%p218) target = $region36
    $region35: #{downsample_forward.2} parent=5 // pred_region
      %s222 = ssub.s32 %s13, 1
      %p223 = scmp.lt.s32.totalorder %s18, 1
      %s224 = scalar_select %p223, %s18, 1
      %s225 = smul.addr %s224, 54
      %s226 = smul.addr %s225, 8
      %s227 = scalar_lea.vmem %s0, %s226
      %p228 = pneg %p39
      %p229 = pneg %p36
      %p230 = pneg %p60
      %p231 = pneg %p57
      %p232 = pneg %p81
      %p233 = pneg %p78
      %p234 = pneg %p102
      %p235 = pneg %p99
      %p236 = pneg %p128
      %p237 = pneg %p125
      %p238 = scmp.lt.s32.totalorder %s18, 1
      %s239 = scalar_select %p238, %s18, 1
      %s240 = smul.addr %s239, 8
      %s241 = smul.addr %s240, 8
      %s242 = scalar_lea.vmem %s4, %s241
      %p243 = pneg %p154
      %p244 = pneg %p151
      %p245 = scmp.lt.s32.totalorder %s18, 1
      %s246 = scalar_select %p245, %s18, 1
      %s247 = smul.addr %s246, 8
      %s248 = smul.addr %s247, 8
      %s249 = scalar_lea.vmem %s5, %s248
      %p250 = pneg %p180
      %p251 = pneg %p177
      %p252 = scmp.lt.s32.totalorder %s18, 1
      %s253 = scalar_select %p252, %s18, 1
      %s254 = smul.addr %s253, 8
      %s255 = scalar_lea.vmem %s6, %s254
      %p256 = scmp.lt.s32.totalorder %s18, 1
      %s257 = scalar_select %p256, %s18, 1
      %s258 = smul.addr %s257, 54
      %s259 = smul.addr %s258, 8
      %s260 = scalar_lea.vmem %s0, %s259
      %p261 = scmp.lt.s32.totalorder %s18, 1
      %s262 = scalar_select %p261, %s18, 1
      %s263 = smul.addr %s262, 8
      %s264 = smul.addr %s263, 8
      %s265 = scalar_lea.vmem %s4, %s264
      %p266 = scmp.lt.s32.totalorder %s18, 1
      %s267 = scalar_select %p266, %s18, 1
      %s268 = smul.addr %s267, 8
      %s269 = smul.addr %s268, 8
      %s270 = scalar_lea.vmem %s5, %s269
      %p271 = scmp.lt.s32.totalorder %s18, 1
      %s272 = scalar_select %p271, %s18, 1
      %s273 = smul.addr %s272, 8
      %s274 = scalar_lea.vmem %s6, %s273
      %v276 = vld [vmem:[%s260] ss:$2 sm:$0xff]
      %s277 = scalar_lea.vmem %s260, 48
      %v278 = vld [vmem:[%s277] ss:$2 sm:$0xff]
      %s279 = scalar_lea.vmem %s260, 96
      %v280 = vld [vmem:[%s279] ss:$2 sm:$0xff]
      %s281 = scalar_lea.vmem %s260, 144
      %v282 = vld [vmem:[%s281] ss:$2 sm:$0xff]
      %s283 = scalar_lea.vmem %s260, 192
      %v284 = vld [vmem:[%s283] ss:$2 sm:$0xff]
      %s285 = scalar_lea.vmem %s260, 240
      %v286 = vld [vmem:[%s285] ss:$2 sm:$0xff]
      %s287 = scalar_lea.vmem %s260, 288
      %v288 = vld [vmem:[%s287] ss:$2 sm:$0xff]
      %s289 = scalar_lea.vmem %s260, 336
      %v290 = vld [vmem:[%s289] ss:$2 sm:$0xff]
      %s291 = scalar_lea.vmem %s260, 1
      %v292 = vld [vmem:[%s291] ss:$2 sm:$0xff]
      %s293 = scalar_lea.vmem %s260, 49
      %v294 = vld [vmem:[%s293] ss:$2 sm:$0xff]
      %s295 = scalar_lea.vmem %s260, 97
      %v296 = vld [vmem:[%s295] ss:$2 sm:$0xff]
      %s297 = scalar_lea.vmem %s260, 145
      %v298 = vld [vmem:[%s297] ss:$2 sm:$0xff]
      %s299 = scalar_lea.vmem %s260, 193
      %v300 = vld [vmem:[%s299] ss:$2 sm:$0xff]
      %s301 = scalar_lea.vmem %s260, 241
      %v302 = vld [vmem:[%s301] ss:$2 sm:$0xff]
      %s303 = scalar_lea.vmem %s260, 289
      %v304 = vld [vmem:[%s303] ss:$2 sm:$0xff]
      %s305 = scalar_lea.vmem %s260, 337
      %v306 = vld [vmem:[%s305] ss:$2 sm:$0xff]
      %s307 = scalar_lea.vmem %s260, 2
      %v308 = vld [vmem:[%s307] ss:$2 sm:$0xff]
      %s309 = scalar_lea.vmem %s260, 50
      %v310 = vld [vmem:[%s309] ss:$2 sm:$0xff]
      %s311 = scalar_lea.vmem %s260, 98
      %v312 = vld [vmem:[%s311] ss:$2 sm:$0xff]
      %s313 = scalar_lea.vmem %s260, 146
      %v314 = vld [vmem:[%s313] ss:$2 sm:$0xff]
      %s315 = scalar_lea.vmem %s260, 194
      %v316 = vld [vmem:[%s315] ss:$2 sm:$0xff]
      %s317 = scalar_lea.vmem %s260, 242
      %v318 = vld [vmem:[%s317] ss:$2 sm:$0xff]
      %s319 = scalar_lea.vmem %s260, 290
      %v320 = vld [vmem:[%s319] ss:$2 sm:$0xff]
      %s321 = scalar_lea.vmem %s260, 338
      %v322 = vld [vmem:[%s321] ss:$2 sm:$0xff]
      %s323 = scalar_lea.vmem %s260, 24
      %v324 = vld [vmem:[%s323] ss:$2 sm:$0xff]
      %s325 = scalar_lea.vmem %s323, 48
      %v326 = vld [vmem:[%s325] ss:$2 sm:$0xff]
      %s327 = scalar_lea.vmem %s323, 96
      %v328 = vld [vmem:[%s327] ss:$2 sm:$0xff]
      %s329 = scalar_lea.vmem %s323, 144
      %v330 = vld [vmem:[%s329] ss:$2 sm:$0xff]
      %s331 = scalar_lea.vmem %s323, 192
      %v332 = vld [vmem:[%s331] ss:$2 sm:$0xff]
      %s333 = scalar_lea.vmem %s323, 240
      %v334 = vld [vmem:[%s333] ss:$2 sm:$0xff]
      %s335 = scalar_lea.vmem %s323, 288
      %v336 = vld [vmem:[%s335] ss:$2 sm:$0xff]
      %s337 = scalar_lea.vmem %s323, 336
      %v338 = vld [vmem:[%s337] ss:$2 sm:$0xff]
      %s339 = scalar_lea.vmem %s323, 1
      %v340 = vld [vmem:[%s339] ss:$2 sm:$0xff]
      %s341 = scalar_lea.vmem %s323, 49
      %v342 = vld [vmem:[%s341] ss:$2 sm:$0xff]
      %s343 = scalar_lea.vmem %s323, 97
      %v344 = vld [vmem:[%s343] ss:$2 sm:$0xff]
      %s345 = scalar_lea.vmem %s323, 145
      %v346 = vld [vmem:[%s345] ss:$2 sm:$0xff]
      %s347 = scalar_lea.vmem %s323, 193
      %v348 = vld [vmem:[%s347] ss:$2 sm:$0xff]
      %s349 = scalar_lea.vmem %s323, 241
      %v350 = vld [vmem:[%s349] ss:$2 sm:$0xff]
      %s351 = scalar_lea.vmem %s323, 289
      %v352 = vld [vmem:[%s351] ss:$2 sm:$0xff]
      %s353 = scalar_lea.vmem %s323, 337
      %v354 = vld [vmem:[%s353] ss:$2 sm:$0xff]
      %s355 = scalar_lea.vmem %s323, 2
      %v356 = vld [vmem:[%s355] ss:$2 sm:$0xff]
      %s357 = scalar_lea.vmem %s323, 50
      %v358 = vld [vmem:[%s357] ss:$2 sm:$0xff]
      %s359 = scalar_lea.vmem %s323, 98
      %v360 = vld [vmem:[%s359] ss:$2 sm:$0xff]
      %s361 = scalar_lea.vmem %s323, 146
      %v362 = vld [vmem:[%s361] ss:$2 sm:$0xff]
      %s363 = scalar_lea.vmem %s323, 194
      %v364 = vld [vmem:[%s363] ss:$2 sm:$0xff]
      %s365 = scalar_lea.vmem %s323, 242
      %v366 = vld [vmem:[%s365] ss:$2 sm:$0xff]
      %s367 = scalar_lea.vmem %s323, 290
      %v368 = vld [vmem:[%s367] ss:$2 sm:$0xff]
      %s369 = scalar_lea.vmem %s323, 338
      %v370 = vld [vmem:[%s369] ss:$2 sm:$0xff]
      %s371 = scalar_lea.vmem %s260, 48
      %v372 = vld [vmem:[%s371] ss:$2 sm:$0xff]
      %s373 = scalar_lea.vmem %s371, 48
      %v374 = vld [vmem:[%s373] ss:$2 sm:$0xff]
      %s375 = scalar_lea.vmem %s371, 96
      %v376 = vld [vmem:[%s375] ss:$2 sm:$0xff]
      %s377 = scalar_lea.vmem %s371, 144
      %v378 = vld [vmem:[%s377] ss:$2 sm:$0xff]
      %s379 = scalar_lea.vmem %s371, 192
      %v380 = vld [vmem:[%s379] ss:$2 sm:$0xff]
      %s381 = scalar_lea.vmem %s371, 240
      %v382 = vld [vmem:[%s381] ss:$2 sm:$0xff]
      %s383 = scalar_lea.vmem %s371, 288
      %v384 = vld [vmem:[%s383] ss:$2 sm:$0xff]
      %s385 = scalar_lea.vmem %s371, 336
      %v386 = vld [vmem:[%s385] ss:$2 sm:$0xff]
      %s387 = scalar_lea.vmem %s371, 1
      %v388 = vld [vmem:[%s387] ss:$2 sm:$0xff]
      %s389 = scalar_lea.vmem %s371, 49
      %v390 = vld [vmem:[%s389] ss:$2 sm:$0xff]
      %s391 = scalar_lea.vmem %s371, 97
      %v392 = vld [vmem:[%s391] ss:$2 sm:$0xff]
      %s393 = scalar_lea.vmem %s371, 145
      %v394 = vld [vmem:[%s393] ss:$2 sm:$0xff]
      %s395 = scalar_lea.vmem %s371, 193
      %v396 = vld [vmem:[%s395] ss:$2 sm:$0xff]
      %s397 = scalar_lea.vmem %s371, 241
      %v398 = vld [vmem:[%s397] ss:$2 sm:$0xff]
      %s399 = scalar_lea.vmem %s371, 289
      %v400 = vld [vmem:[%s399] ss:$2 sm:$0xff]
      %s401 = scalar_lea.vmem %s371, 337
      %v402 = vld [vmem:[%s401] ss:$2 sm:$0xff]
      %s403 = scalar_lea.vmem %s371, 2
      %v404 = vld [vmem:[%s403] ss:$2 sm:$0xff]
      %s405 = scalar_lea.vmem %s371, 50
      %v406 = vld [vmem:[%s405] ss:$2 sm:$0xff]
      %s407 = scalar_lea.vmem %s371, 98
      %v408 = vld [vmem:[%s407] ss:$2 sm:$0xff]
      %s409 = scalar_lea.vmem %s371, 146
      %v410 = vld [vmem:[%s409] ss:$2 sm:$0xff]
      %s411 = scalar_lea.vmem %s371, 194
      %v412 = vld [vmem:[%s411] ss:$2 sm:$0xff]
      %s413 = scalar_lea.vmem %s371, 242
      %v414 = vld [vmem:[%s413] ss:$2 sm:$0xff]
      %s415 = scalar_lea.vmem %s371, 290
      %v416 = vld [vmem:[%s415] ss:$2 sm:$0xff]
      %s417 = scalar_lea.vmem %s371, 338
      %v418 = vld [vmem:[%s417] ss:$2 sm:$0xff]
      %v419 = vadd.f32 %v340, %v356
      %v420 = vadd.f32 %v342, %v358
      %v421 = vadd.f32 %v344, %v360
      %v422 = vadd.f32 %v346, %v362
      %v423 = vadd.f32 %v348, %v364
      %v424 = vadd.f32 %v350, %v366
      %v425 = vadd.f32 %v352, %v368
      %v426 = vadd.f32 %v354, %v370
      %v427 = vadd.f32 %v419, %v388
      %v428 = vadd.f32 %v420, %v390
      %v429 = vadd.f32 %v421, %v392
      %v430 = vadd.f32 %v422, %v394
      %v431 = vadd.f32 %v423, %v396
      %v432 = vadd.f32 %v424, %v398
      %v433 = vadd.f32 %v425, %v400
      %v434 = vadd.f32 %v426, %v402
      %v435 = vadd.f32 %v427, %v404
      %v436 = vadd.f32 %v428, %v406
      %v437 = vadd.f32 %v429, %v408
      %v438 = vadd.f32 %v430, %v410
      %v439 = vadd.f32 %v431, %v412
      %v440 = vadd.f32 %v432, %v414
      %v441 = vadd.f32 %v433, %v416
      %v442 = vadd.f32 %v434, %v418
      %v443 = vmul.f32 %v435, 0.25
      %v444 = vmul.f32 %v436, 0.25
      %v445 = vmul.f32 %v437, 0.25
      %v446 = vmul.f32 %v438, 0.25
      %v447 = vmul.f32 %v439, 0.25
      %v448 = vmul.f32 %v440, 0.25
      %v449 = vmul.f32 %v441, 0.25
      %v450 = vmul.f32 %v442, 0.25
      %v451 = vpack.c.bf16 %v444, %v443
      %v452 = vpack.c.bf16 %v446, %v445
      %v453 = vpack.c.bf16 %v448, %v447
      %v454 = vpack.c.bf16 %v450, %v449
      %v455 = vld [vmem:[%s1] sm:$0xf]
      %v456 = vld [vmem:[%s1 + $0x4] sm:$0xf]
      %v457 = vld [vmem:[%s1 + $0x8] sm:$0xf]
      %v458 = vld [vmem:[%s1 + $0xc] sm:$0xf]
      %v459 = vld [vmem:[%s1 + $0x10] sm:$0xf]
      %v460 = vld [vmem:[%s1 + $0x14] sm:$0xf]
      %v461 = vld [vmem:[%s1 + $0x18] sm:$0xf]
      %v462 = vld [vmem:[%s1 + $0x1c] sm:$0xf]
      %v463 = vld [vmem:[%s1 + $0x20] sm:$0xf]
      %v464 = vld [vmem:[%s1 + $0x24] sm:$0xf]
      %v465 = vld [vmem:[%s1 + $0x28] sm:$0xf]
      %v466 = vld [vmem:[%s1 + $0x2c] sm:$0xf]
      %v467 = vld [vmem:[%s1 + $0x30] sm:$0xf]
      %v468 = vld [vmem:[%s1 + $0x34] sm:$0xf]
      %v469 = vld [vmem:[%s1 + $0x38] sm:$0xf]
      %v470 = vld [vmem:[%s1 + $0x3c] sm:$0xf]
      %v487 = vunpack.c.l.b16 %v455
      %v488 = vunpack.c.l.b16 %v456
      %v489 = vunpack.c.l.b16 %v457
      %v490 = vunpack.c.l.b16 %v458
      %v491 = vunpack.c.l.b16 %v459
      %v492 = vunpack.c.l.b16 %v460
      %v493 = vunpack.c.l.b16 %v461
      %v494 = vunpack.c.l.b16 %v462
      %v495 = vunpack.c.l.b16 %v463
      %v496 = vunpack.c.l.b16 %v464
      %v497 = vunpack.c.l.b16 %v465
      %v498 = vunpack.c.l.b16 %v466
      %v499 = vunpack.c.l.b16 %v467
      %v500 = vunpack.c.l.b16 %v468
      %v501 = vunpack.c.l.b16 %v469
      %v502 = vunpack.c.l.b16 %v470
      %v503 = vpack.c.b16 %v488, %v487
      %v504 = vpack.c.b16 %v490, %v489
      %v505 = vpack.c.b16 %v492, %v491
      %v506 = vpack.c.b16 %v494, %v493
      %v507 = vpack.c.b16 %v496, %v495
      %v508 = vpack.c.b16 %v498, %v497
      %v509 = vpack.c.b16 %v500, %v499
      %v510 = vpack.c.b16 %v502, %v501
      %519 = vmatprep.subr.bf16.mxu0 0
      %520 = vmatpush1.bf16.msra.mxu0 %v503
      %521 = vmatprep.subr.bf16.mxu0 0
      %522 = vmatpush1.bf16.msra.mxu0 %v504
      %523 = vmatprep.subr.bf16.mxu0 0
      %524 = vmatpush1.bf16.msra.mxu0 %v505
      %525 = vmatprep.subr.bf16.mxu0 0
      %526 = vmatpush1.bf16.msra.mxu0 %v506
      %527 = vmatprep.subr.bf16.mxu0 0
      %528 = vmatpush1.bf16.msra.mxu0 %v507
      %529 = vmatprep.subr.bf16.mxu0 0
      %530 = vmatpush1.bf16.msra.mxu0 %v508
      %531 = vmatprep.subr.bf16.mxu0 0
      %532 = vmatpush1.bf16.msra.mxu0 %v509
      %533 = vmatprep.subr.bf16.mxu0 0
      %534 = vmatpush1.bf16.msra.mxu0 %v510
      %535 = vmatprep.subr.bf16.mxu0 0
      %536 = vmatpush1.bf16.msra.mxu0 0
      %537 = vmatprep.subr.bf16.mxu0 0
      %538 = vmatpush1.bf16.msra.mxu0 0
      %539 = vmatprep.subr.bf16.mxu0 0
      %540 = vmatpush1.bf16.msra.mxu0 0
      %541 = vmatprep.subr.bf16.mxu0 0
      %542 = vmatpush1.bf16.msra.mxu0 0
      %543 = vmatprep.subr.bf16.mxu0 0
      %544 = vmatpush1.bf16.msra.mxu0 0
      %545 = vmatprep.subr.bf16.mxu0 0
      %546 = vmatpush1.bf16.msra.mxu0 0
      %547 = vmatprep.subr.bf16.mxu0 0
      %548 = vmatpush1.bf16.msra.mxu0 0
      %549 = vmatprep.subr.bf16.mxu0 0
      %550 = vmatpush1.bf16.msra.mxu0 0
      %551 = vmatprep.mubr.bf16.mxu0 0
      %552 = vmatmul.mubr.bf16.gmra.mrb[0].mxu0 %v451
      %v553 = vpop.f32.mrb[0].mxu0
      %v554 = vadd.f32 0.0, %v553
      %v555 = vpop.f32.mrb[0].mxu0
      %v556 = vpop.f32.mrb[0].mxu0
      %v557 = vadd.f32 0.0, %v556
      %v558 = vpop.f32.mrb[0].mxu0
      %559 = vmatprep.mubr.bf16.mxu0 0
      %560 = vmatmul.mubr.bf16.gmra.mrb[0].mxu0 %v452
      %v561 = vpop.f32.mrb[0].mxu0
      %v562 = vadd.f32 0.0, %v561
      %v563 = vpop.f32.mrb[0].mxu0
      %v564 = vpop.f32.mrb[0].mxu0
      %v565 = vadd.f32 0.0, %v564
      %v566 = vpop.f32.mrb[0].mxu0
      %567 = vmatprep.mubr.bf16.mxu0 0
      %568 = vmatmul.mubr.bf16.gmra.mrb[0].mxu0 %v453
      %v569 = vpop.f32.mrb[0].mxu0
      %v570 = vadd.f32 0.0, %v569
      %v571 = vpop.f32.mrb[0].mxu0
      %v572 = vpop.f32.mrb[0].mxu0
      %v573 = vadd.f32 0.0, %v572
      %v574 = vpop.f32.mrb[0].mxu0
      %575 = vmatprep.mubr.bf16.mxu0 0
      %576 = vmatmul.mubr.bf16.gmra.mrb[0].mxu0 %v454
      %v577 = vpop.f32.mrb[0].mxu0
      %v578 = vadd.f32 0.0, %v577
      %v579 = vpop.f32.mrb[0].mxu0
      %v580 = vpop.f32.mrb[0].mxu0
      %v581 = vadd.f32 0.0, %v580
      %v582 = vpop.f32.mrb[0].mxu0
      %583 = vdwg.mxu0
      %v584 = vpack.c.bf16 %v278, %v276
      %v585 = vpack.c.bf16 %v282, %v280
      %v586 = vpack.c.bf16 %v286, %v284
      %v587 = vpack.c.bf16 %v290, %v288
      %v588 = vpack.c.bf16 %v294, %v292
      %v589 = vpack.c.bf16 %v298, %v296
      %v590 = vpack.c.bf16 %v302, %v300
      %v591 = vpack.c.bf16 %v306, %v304
      %v592 = vpack.c.bf16 %v310, %v308
      %v593 = vpack.c.bf16 %v314, %v312
      %v594 = vpack.c.bf16 %v318, %v316
      %v595 = vpack.c.bf16 %v322, %v320
      %v596 = vpack.c.bf16 %v326, %v324
      %v597 = vpack.c.bf16 %v330, %v328
      %v598 = vpack.c.bf16 %v334, %v332
      %v599 = vpack.c.bf16 %v338, %v336
      %v600 = vpack.c.bf16 %v342, %v340
      %v601 = vpack.c.bf16 %v346, %v344
      %v602 = vpack.c.bf16 %v350, %v348
      %v603 = vpack.c.bf16 %v354, %v352
      %v604 = vpack.c.bf16 %v358, %v356
      %v605 = vpack.c.bf16 %v362, %v360
      %v606 = vpack.c.bf16 %v366, %v364
      %v607 = vpack.c.bf16 %v370, %v368
      %v608 = vpack.c.bf16 %v374, %v372
      %v609 = vpack.c.bf16 %v378, %v376
      %v610 = vpack.c.bf16 %v382, %v380
      %v611 = vpack.c.bf16 %v386, %v384
      %v612 = vpack.c.bf16 %v390, %v388
      %v613 = vpack.c.bf16 %v394, %v392
      %v614 = vpack.c.bf16 %v398, %v396
      %v615 = vpack.c.bf16 %v402, %v400
      %v616 = vpack.c.bf16 %v406, %v404
      %v617 = vpack.c.bf16 %v410, %v408
      %v618 = vpack.c.bf16 %v414, %v412
      %v619 = vpack.c.bf16 %v418, %v416
      %v620 = vld [vmem:[%s2] sm:$0xf]
      %v621 = vld [vmem:[%s2 + $0x4] sm:$0xf]
      %v622 = vld [vmem:[%s2 + $0x8] sm:$0xf]
      %v623 = vld [vmem:[%s2 + $0xc] sm:$0xf]
      %v624 = vld [vmem:[%s2 + $0x10] sm:$0xf]
      %v625 = vld [vmem:[%s2 + $0x14] sm:$0xf]
      %v626 = vld [vmem:[%s2 + $0x18] sm:$0xf]
      %v627 = vld [vmem:[%s2 + $0x1c] sm:$0xf]
      %v628 = vld [vmem:[%s2 + $0x20] sm:$0xf]
      %v629 = vld [vmem:[%s2 + $0x24] sm:$0xf]
      %v630 = vld [vmem:[%s2 + $0x28] sm:$0xf]
      %v631 = vld [vmem:[%s2 + $0x2c] sm:$0xf]
      %v632 = vld [vmem:[%s2 + $0x30] sm:$0xf]
      %v633 = vld [vmem:[%s2 + $0x34] sm:$0xf]
      %v634 = vld [vmem:[%s2 + $0x38] sm:$0xf]
      %v635 = vld [vmem:[%s2 + $0x3c] sm:$0xf]
      %v636 = vld [vmem:[%s2 + $0x40] sm:$0xf]
      %v637 = vld [vmem:[%s2 + $0x44] sm:$0xf]
      %v638 = vld [vmem:[%s2 + $0x48] sm:$0xf]
      %v639 = vld [vmem:[%s2 + $0x4c] sm:$0xf]
      %v640 = vld [vmem:[%s2 + $0x50] sm:$0xf]
      %v641 = vld [vmem:[%s2 + $0x54] sm:$0xf]
      %v642 = vld [vmem:[%s2 + $0x58] sm:$0xf]
      %v643 = vld [vmem:[%s2 + $0x5c] sm:$0xf]
      %v644 = vld [vmem:[%s2 + $0x60] sm:$0xf]
      %v645 = vld [vmem:[%s2 + $0x64] sm:$0xf]
      %v646 = vld [vmem:[%s2 + $0x68] sm:$0xf]
      %v647 = vld [vmem:[%s2 + $0x6c] sm:$0xf]
      %v648 = vld [vmem:[%s2 + $0x70] sm:$0xf]
      %v649 = vld [vmem:[%s2 + $0x74] sm:$0xf]
      %v650 = vld [vmem:[%s2 + $0x78] sm:$0xf]
      %v651 = vld [vmem:[%s2 + $0x7c] sm:$0xf]
      %v652 = vld [vmem:[%s2 + $0x80] sm:$0xf]
      %v653 = vld [vmem:[%s2 + $0x84] sm:$0xf]
      %v654 = vld [vmem:[%s2 + $0x88] sm:$0xf]
      %v655 = vld [vmem:[%s2 + $0x8c] sm:$0xf]
      %v656 = vld [vmem:[%s2 + $0x90] sm:$0xf]
      %v657 = vld [vmem:[%s2 + $0x94] sm:$0xf]
      %v658 = vld [vmem:[%s2 + $0x98] sm:$0xf]
      %v659 = vld [vmem:[%s2 + $0x9c] sm:$0xf]
      %v660 = vld [vmem:[%s2 + $0xa0] sm:$0xf]
      %v661 = vld [vmem:[%s2 + $0xa4] sm:$0xf]
      %v662 = vld [vmem:[%s2 + $0xa8] sm:$0xf]
      %v663 = vld [vmem:[%s2 + $0xac] sm:$0xf]
      %v664 = vld [vmem:[%s2 + $0xb0] sm:$0xf]
      %v665 = vld [vmem:[%s2 + $0xb4] sm:$0xf]
      %v666 = vld [vmem:[%s2 + $0xb8] sm:$0xf]
      %v667 = vld [vmem:[%s2 + $0xbc] sm:$0xf]
      %v668 = vld [vmem:[%s2 + $0xc0] sm:$0xf]
      %v669 = vld [vmem:[%s2 + $0xc4] sm:$0xf]
      %v670 = vld [vmem:[%s2 + $0xc8] sm:$0xf]
      %v671 = vld [vmem:[%s2 + $0xcc] sm:$0xf]
      %v672 = vld [vmem:[%s2 + $0xd0] sm:$0xf]
      %v673 = vld [vmem:[%s2 + $0xd4] sm:$0xf]
      %v674 = vld [vmem:[%s2 + $0xd8] sm:$0xf]
      %v675 = vld [vmem:[%s2 + $0xdc] sm:$0xf]
      %v676 = vld [vmem:[%s2 + $0xe0] sm:$0xf]
      %v677 = vld [vmem:[%s2 + $0xe4] sm:$0xf]
      %v678 = vld [vmem:[%s2 + $0xe8] sm:$0xf]
      %v679 = vld [vmem:[%s2 + $0xec] sm:$0xf]
      %v680 = vld [vmem:[%s2 + $0xf0] sm:$0xf]
      %v681 = vld [vmem:[%s2 + $0xf4] sm:$0xf]
      %v682 = vld [vmem:[%s2 + $0xf8] sm:$0xf]
      %v683 = vld [vmem:[%s2 + $0xfc] sm:$0xf]
      %v684 = vld [vmem:[%s2 + $0x100] sm:$0xf]
      %v685 = vld [vmem:[%s2 + $0x104] sm:$0xf]
      %v686 = vld [vmem:[%s2 + $0x108] sm:$0xf]
      %v687 = vld [vmem:[%s2 + $0x10c] sm:$0xf]
      %v688 = vld [vmem:[%s2 + $0x110] sm:$0xf]
      %v689 = vld [vmem:[%s2 + $0x114] sm:$0xf]
      %v690 = vld [vmem:[%s2 + $0x118] sm:$0xf]
      %v691 = vld [vmem:[%s2 + $0x11c] sm:$0xf]
      %v692 = vld [vmem:[%s2 + $0x120] sm:$0xf]
      %v693 = vld [vmem:[%s2 + $0x124] sm:$0xf]
      %v694 = vld [vmem:[%s2 + $0x128] sm:$0xf]
      %v695 = vld [vmem:[%s2 + $0x12c] sm:$0xf]
      %v696 = vld [vmem:[%s2 + $0x130] sm:$0xf]
      %v697 = vld [vmem:[%s2 + $0x134] sm:$0xf]
      %v698 = vld [vmem:[%s2 + $0x138] sm:$0xf]
      %v699 = vld [vmem:[%s2 + $0x13c] sm:$0xf]
      %v700 = vld [vmem:[%s2 + $0x140] sm:$0xf]
      %v701 = vld [vmem:[%s2 + $0x144] sm:$0xf]
      %v702 = vld [vmem:[%s2 + $0x148] sm:$0xf]
      %v703 = vld [vmem:[%s2 + $0x14c] sm:$0xf]
      %v704 = vld [vmem:[%s2 + $0x150] sm:$0xf]
      %v705 = vld [vmem:[%s2 + $0x154] sm:$0xf]
      %v706 = vld [vmem:[%s2 + $0x158] sm:$0xf]
      %v707 = vld [vmem:[%s2 + $0x15c] sm:$0xf]
      %v708 = vld [vmem:[%s2 + $0x160] sm:$0xf]
      %v709 = vld [vmem:[%s2 + $0x164] sm:$0xf]
      %v710 = vld [vmem:[%s2 + $0x168] sm:$0xf]
      %v711 = vld [vmem:[%s2 + $0x16c] sm:$0xf]
      %v712 = vld [vmem:[%s2 + $0x170] sm:$0xf]
      %v713 = vld [vmem:[%s2 + $0x174] sm:$0xf]
      %v714 = vld [vmem:[%s2 + $0x178] sm:$0xf]
      %v715 = vld [vmem:[%s2 + $0x17c] sm:$0xf]
      %v716 = vld [vmem:[%s2 + $0x180] sm:$0xf]
      %v717 = vld [vmem:[%s2 + $0x184] sm:$0xf]
      %v718 = vld [vmem:[%s2 + $0x188] sm:$0xf]
      %v719 = vld [vmem:[%s2 + $0x18c] sm:$0xf]
      %v720 = vld [vmem:[%s2 + $0x190] sm:$0xf]
      %v721 = vld [vmem:[%s2 + $0x194] sm:$0xf]
      %v722 = vld [vmem:[%s2 + $0x198] sm:$0xf]
      %v723 = vld [vmem:[%s2 + $0x19c] sm:$0xf]
      %v724 = vld [vmem:[%s2 + $0x1a0] sm:$0xf]
      %v725 = vld [vmem:[%s2 + $0x1a4] sm:$0xf]
      %v726 = vld [vmem:[%s2 + $0x1a8] sm:$0xf]
      %v727 = vld [vmem:[%s2 + $0x1ac] sm:$0xf]
      %v728 = vld [vmem:[%s2 + $0x1b0] sm:$0xf]
      %v729 = vld [vmem:[%s2 + $0x1b4] sm:$0xf]
      %v730 = vld [vmem:[%s2 + $0x1b8] sm:$0xf]
      %v731 = vld [vmem:[%s2 + $0x1bc] sm:$0xf]
      %v732 = vld [vmem:[%s2 + $0x1c0] sm:$0xf]
      %v733 = vld [vmem:[%s2 + $0x1c4] sm:$0xf]
      %v734 = vld [vmem:[%s2 + $0x1c8] sm:$0xf]
      %v735 = vld [vmem:[%s2 + $0x1cc] sm:$0xf]
      %v736 = vld [vmem:[%s2 + $0x1d0] sm:$0xf]
      %v737 = vld [vmem:[%s2 + $0x1d4] sm:$0xf]
      %v738 = vld [vmem:[%s2 + $0x1d8] sm:$0xf]
      %v739 = vld [vmem:[%s2 + $0x1dc] sm:$0xf]
      %v740 = vld [vmem:[%s2 + $0x1e0] sm:$0xf]
      %v741 = vld [vmem:[%s2 + $0x1e4] sm:$0xf]
      %v742 = vld [vmem:[%s2 + $0x1e8] sm:$0xf]
      %v743 = vld [vmem:[%s2 + $0x1ec] sm:$0xf]
      %v744 = vld [vmem:[%s2 + $0x1f0] sm:$0xf]
      %v745 = vld [vmem:[%s2 + $0x1f4] sm:$0xf]
      %v746 = vld [vmem:[%s2 + $0x1f8] sm:$0xf]
      %v747 = vld [vmem:[%s2 + $0x1fc] sm:$0xf]
      %v748 = vld [vmem:[%s2 + $0x200] sm:$0xf]
      %v749 = vld [vmem:[%s2 + $0x204] sm:$0xf]
      %v750 = vld [vmem:[%s2 + $0x208] sm:$0xf]
      %v751 = vld [vmem:[%s2 + $0x20c] sm:$0xf]
      %v752 = vld [vmem:[%s2 + $0x210] sm:$0xf]
      %v753 = vld [vmem:[%s2 + $0x214] sm:$0xf]
      %v754 = vld [vmem:[%s2 + $0x218] sm:$0xf]
      %v755 = vld [vmem:[%s2 + $0x21c] sm:$0xf]
      %v756 = vld [vmem:[%s2 + $0x220] sm:$0xf]
      %v757 = vld [vmem:[%s2 + $0x224] sm:$0xf]
      %v758 = vld [vmem:[%s2 + $0x228] sm:$0xf]
      %v759 = vld [vmem:[%s2 + $0x22c] sm:$0xf]
      %v760 = vld [vmem:[%s2 + $0x230] sm:$0xf]
      %v761 = vld [vmem:[%s2 + $0x234] sm:$0xf]
      %v762 = vld [vmem:[%s2 + $0x238] sm:$0xf]
      %v763 = vld [vmem:[%s2 + $0x23c] sm:$0xf]
      %v908 = vunpack.c.l.b16 %v620
      %v909 = vunpack.c.l.b16 %v621
      %v910 = vunpack.c.l.b16 %v622
      %v911 = vunpack.c.l.b16 %v623
      %v912 = vunpack.c.l.b16 %v624
      %v913 = vunpack.c.l.b16 %v625
      %v914 = vunpack.c.l.b16 %v626
      %v915 = vunpack.c.l.b16 %v627
      %v916 = vunpack.c.l.b16 %v628
      %v917 = vunpack.c.l.b16 %v629
      %v918 = vunpack.c.l.b16 %v630
      %v919 = vunpack.c.l.b16 %v631
      %v920 = vunpack.c.l.b16 %v632
      %v921 = vunpack.c.l.b16 %v633
      %v922 = vunpack.c.l.b16 %v634
      %v923 = vunpack.c.l.b16 %v635
      %v924 = vunpack.c.l.b16 %v636
      %v925 = vunpack.c.l.b16 %v637
      %v926 = vunpack.c.l.b16 %v638
      %v927 = vunpack.c.l.b16 %v639
      %v928 = vunpack.c.l.b16 %v640
      %v929 = vunpack.c.l.b16 %v641
      %v930 = vunpack.c.l.b16 %v642
      %v931 = vunpack.c.l.b16 %v643
      %v932 = vunpack.c.l.b16 %v644
      %v933 = vunpack.c.l.b16 %v645
      %v934 = vunpack.c.l.b16 %v646
      %v935 = vunpack.c.l.b16 %v647
      %v936 = vunpack.c.l.b16 %v648
      %v937 = vunpack.c.l.b16 %v649
      %v938 = vunpack.c.l.b16 %v650
      %v939 = vunpack.c.l.b16 %v651
      %v940 = vunpack.c.l.b16 %v652
      %v941 = vunpack.c.l.b16 %v653
      %v942 = vunpack.c.l.b16 %v654
      %v943 = vunpack.c.l.b16 %v655
      %v944 = vunpack.c.l.b16 %v656
      %v945 = vunpack.c.l.b16 %v657
      %v946 = vunpack.c.l.b16 %v658
      %v947 = vunpack.c.l.b16 %v659
      %v948 = vunpack.c.l.b16 %v660
      %v949 = vunpack.c.l.b16 %v661
      %v950 = vunpack.c.l.b16 %v662
      %v951 = vunpack.c.l.b16 %v663
      %v952 = vunpack.c.l.b16 %v664
      %v953 = vunpack.c.l.b16 %v665
      %v954 = vunpack.c.l.b16 %v666
      %v955 = vunpack.c.l.b16 %v667
      %v956 = vunpack.c.l.b16 %v668
      %v957 = vunpack.c.l.b16 %v669
      %v958 = vunpack.c.l.b16 %v670
      %v959 = vunpack.c.l.b16 %v671
      %v960 = vunpack.c.l.b16 %v672
      %v961 = vunpack.c.l.b16 %v673
      %v962 = vunpack.c.l.b16 %v674
      %v963 = vunpack.c.l.b16 %v675
      %v964 = vunpack.c.l.b16 %v676
      %v965 = vunpack.c.l.b16 %v677
      %v966 = vunpack.c.l.b16 %v678
      %v967 = vunpack.c.l.b16 %v679
      %v968 = vunpack.c.l.b16 %v680
      %v969 = vunpack.c.l.b16 %v681
      %v970 = vunpack.c.l.b16 %v682
      %v971 = vunpack.c.l.b16 %v683
      %v972 = vunpack.c.l.b16 %v684
      %v973 = vunpack.c.l.b16 %v685
      %v974 = vunpack.c.l.b16 %v686
      %v975 = vunpack.c.l.b16 %v687
      %v976 = vunpack.c.l.b16 %v688
      %v977 = vunpack.c.l.b16 %v689
      %v978 = vunpack.c.l.b16 %v690
      %v979 = vunpack.c.l.b16 %v691
      %v980 = vunpack.c.l.b16 %v692
      %v981 = vunpack.c.l.b16 %v693
      %v982 = vunpack.c.l.b16 %v694
      %v983 = vunpack.c.l.b16 %v695
      %v984 = vunpack.c.l.b16 %v696
      %v985 = vunpack.c.l.b16 %v697
      %v986 = vunpack.c.l.b16 %v698
      %v987 = vunpack.c.l.b16 %v699
      %v988 = vunpack.c.l.b16 %v700
      %v989 = vunpack.c.l.b16 %v701
      %v990 = vunpack.c.l.b16 %v702
      %v991 = vunpack.c.l.b16 %v703
      %v992 = vunpack.c.l.b16 %v704
      %v993 = vunpack.c.l.b16 %v705
      %v994 = vunpack.c.l.b16 %v706
      %v995 = vunpack.c.l.b16 %v707
      %v996 = vunpack.c.l.b16 %v708
      %v997 = vunpack.c.l.b16 %v709
      %v998 = vunpack.c.l.b16 %v710
      %v999 = vunpack.c.l.b16 %v711
      %v1000 = vunpack.c.l.b16 %v712
      %v1001 = vunpack.c.l.b16 %v713
      %v1002 = vunpack.c.l.b16 %v714
      %v1003 = vunpack.c.l.b16 %v715
      %v1004 = vunpack.c.l.b16 %v716
      %v1005 = vunpack.c.l.b16 %v717
      %v1006 = vunpack.c.l.b16 %v718
      %v1007 = vunpack.c.l.b16 %v719
      %v1008 = vunpack.c.l.b16 %v720
      %v1009 = vunpack.c.l.b16 %v721
      %v1010 = vunpack.c.l.b16 %v722
      %v1011 = vunpack.c.l.b16 %v723
      %v1012 = vunpack.c.l.b16 %v724
      %v1013 = vunpack.c.l.b16 %v725
      %v1014 = vunpack.c.l.b16 %v726
      %v1015 = vunpack.c.l.b16 %v727
      %v1016 = vunpack.c.l.b16 %v728
      %v1017 = vunpack.c.l.b16 %v729
      %v1018 = vunpack.c.l.b16 %v730
      %v1019 = vunpack.c.l.b16 %v731
      %v1020 = vunpack.c.l.b16 %v732
      %v1021 = vunpack.c.l.b16 %v733
      %v1022 = vunpack.c.l.b16 %v734
      %v1023 = vunpack.c.l.b16 %v735
      %v1024 = vunpack.c.l.b16 %v736
      %v1025 = vunpack.c.l.b16 %v737
      %v1026 = vunpack.c.l.b16 %v738
      %v1027 = vunpack.c.l.b16 %v739
      %v1028 = vunpack.c.l.b16 %v740
      %v1029 = vunpack.c.l.b16 %v741
      %v1030 = vunpack.c.l.b16 %v742
      %v1031 = vunpack.c.l.b16 %v743
      %v1032 = vunpack.c.l.b16 %v744
      %v1033 = vunpack.c.l.b16 %v745
      %v1034 = vunpack.c.l.b16 %v746
      %v1035 = vunpack.c.l.b16 %v747
      %v1036 = vunpack.c.l.b16 %v748
      %v1037 = vunpack.c.l.b16 %v749
      %v1038 = vunpack.c.l.b16 %v750
      %v1039 = vunpack.c.l.b16 %v751
      %v1040 = vunpack.c.l.b16 %v752
      %v1041 = vunpack.c.l.b16 %v753
      %v1042 = vunpack.c.l.b16 %v754
      %v1043 = vunpack.c.l.b16 %v755
      %v1044 = vunpack.c.l.b16 %v756
      %v1045 = vunpack.c.l.b16 %v757
      %v1046 = vunpack.c.l.b16 %v758
      %v1047 = vunpack.c.l.b16 %v759
      %v1048 = vunpack.c.l.b16 %v760
      %v1049 = vunpack.c.l.b16 %v761
      %v1050 = vunpack.c.l.b16 %v762
      %v1051 = vunpack.c.l.b16 %v763
      %v1052 = vpack.c.b16 %v909, %v908
      %v1053 = vpack.c.b16 %v911, %v910
      %v1054 = vpack.c.b16 %v913, %v912
      %v1055 = vpack.c.b16 %v915, %v914
      %v1056 = vpack.c.b16 %v917, %v916
      %v1057 = vpack.c.b16 %v919, %v918
      %v1058 = vpack.c.b16 %v921, %v920
      %v1059 = vpack.c.b16 %v923, %v922
      %v1060 = vpack.c.b16 %v925, %v924
      %v1061 = vpack.c.b16 %v927, %v926
      %v1062 = vpack.c.b16 %v929, %v928
      %v1063 = vpack.c.b16 %v931, %v930
      %v1064 = vpack.c.b16 %v933, %v932
      %v1065 = vpack.c.b16 %v935, %v934
      %v1066 = vpack.c.b16 %v937, %v936
      %v1067 = vpack.c.b16 %v939, %v938
      %v1068 = vpack.c.b16 %v941, %v940
      %v1069 = vpack.c.b16 %v943, %v942
      %v1070 = vpack.c.b16 %v945, %v944
      %v1071 = vpack.c.b16 %v947, %v946
      %v1072 = vpack.c.b16 %v949, %v948
      %v1073 = vpack.c.b16 %v951, %v950
      %v1074 = vpack.c.b16 %v953, %v952
      %v1075 = vpack.c.b16 %v955, %v954
      %v1076 = vpack.c.b16 %v957, %v956
      %v1077 = vpack.c.b16 %v959, %v958
      %v1078 = vpack.c.b16 %v961, %v960
      %v1079 = vpack.c.b16 %v963, %v962
      %v1080 = vpack.c.b16 %v965, %v964
      %v1081 = vpack.c.b16 %v967, %v966
      %v1082 = vpack.c.b16 %v969, %v968
      %v1083 = vpack.c.b16 %v971, %v970
      %v1084 = vpack.c.b16 %v973, %v972
      %v1085 = vpack.c.b16 %v975, %v974
      %v1086 = vpack.c.b16 %v977, %v976
      %v1087 = vpack.c.b16 %v979, %v978
      %v1088 = vpack.c.b16 %v981, %v980
      %v1089 = vpack.c.b16 %v983, %v982
      %v1090 = vpack.c.b16 %v985, %v984
      %v1091 = vpack.c.b16 %v987, %v986
      %v1092 = vpack.c.b16 %v989, %v988
      %v1093 = vpack.c.b16 %v991, %v990
      %v1094 = vpack.c.b16 %v993, %v992
      %v1095 = vpack.c.b16 %v995, %v994
      %v1096 = vpack.c.b16 %v997, %v996
      %v1097 = vpack.c.b16 %v999, %v998
      %v1098 = vpack.c.b16 %v1001, %v1000
      %v1099 = vpack.c.b16 %v1003, %v1002
      %v1100 = vpack.c.b16 %v1005, %v1004
      %v1101 = vpack.c.b16 %v1007, %v1006
      %v1102 = vpack.c.b16 %v1009, %v1008
      %v1103 = vpack.c.b16 %v1011, %v1010
      %v1104 = vpack.c.b16 %v1013, %v1012
      %v1105 = vpack.c.b16 %v1015, %v1014
      %v1106 = vpack.c.b16 %v1017, %v1016
      %v1107 = vpack.c.b16 %v1019, %v1018
      %v1108 = vpack.c.b16 %v1021, %v1020
      %v1109 = vpack.c.b16 %v1023, %v1022
      %v1110 = vpack.c.b16 %v1025, %v1024
      %v1111 = vpack.c.b16 %v1027, %v1026
      %v1112 = vpack.c.b16 %v1029, %v1028
      %v1113 = vpack.c.b16 %v1031, %v1030
      %v1114 = vpack.c.b16 %v1033, %v1032
      %v1115 = vpack.c.b16 %v1035, %v1034
      %v1116 = vpack.c.b16 %v1037, %v1036
      %v1117 = vpack.c.b16 %v1039, %v1038
      %v1118 = vpack.c.b16 %v1041, %v1040
      %v1119 = vpack.c.b16 %v1043, %v1042
      %v1120 = vpack.c.b16 %v1045, %v1044
      %v1121 = vpack.c.b16 %v1047, %v1046
      %v1122 = vpack.c.b16 %v1049, %v1048
      %v1123 = vpack.c.b16 %v1051, %v1050
      %1196 = vmatprep.subr.bf16.mxu0 0
      %1197 = vmatpush1.bf16.msra.mxu0 %v1052
      %1198 = vmatprep.subr.bf16.mxu0 0
      %1199 = vmatpush1.bf16.msra.mxu0 %v1053
      %1200 = vmatprep.subr.bf16.mxu0 0
      %1201 = vmatpush1.bf16.msra.mxu0 %v1054
      %1202 = vmatprep.subr.bf16.mxu0 0
      %1203 = vmatpush1.bf16.msra.mxu0 %v1055
      %1204 = vmatprep.subr.bf16.mxu0 0
      %1205 = vmatpush1.bf16.msra.mxu0 %v1056
      %1206 = vmatprep.subr.bf16.mxu0 0
      %1207 = vmatpush1.bf16.msra.mxu0 %v1057
      %1208 = vmatprep.subr.bf16.mxu0 0
      %1209 = vmatpush1.bf16.msra.mxu0 %v1058
      %1210 = vmatprep.subr.bf16.mxu0 0
      %1211 = vmatpush1.bf16.msra.mxu0 %v1059
      %1212 = vmatprep.subr.bf16.mxu0 0
      %1213 = vmatpush1.bf16.msra.mxu0 %v1060
      %1214 = vmatprep.subr.bf16.mxu0 0
      %1215 = vmatpush1.bf16.msra.mxu0 %v1061
      %1216 = vmatprep.subr.bf16.mxu0 0
      %1217 = vmatpush1.bf16.msra.mxu0 %v1062
      %1218 = vmatprep.subr.bf16.mxu0 0
      %1219 = vmatpush1.bf16.msra.mxu0 %v1063
      %1220 = vmatprep.subr.bf16.mxu0 0
      %1221 = vmatpush1.bf16.msra.mxu0 %v1064
      %1222 = vmatprep.subr.bf16.mxu0 0
      %1223 = vmatpush1.bf16.msra.mxu0 %v1065
      %1224 = vmatprep.subr.bf16.mxu0 0
      %1225 = vmatpush1.bf16.msra.mxu0 %v1066
      %1226 = vmatprep.subr.bf16.mxu0 0
      %1227 = vmatpush1.bf16.msra.mxu0 %v1067
      %1228 = vmatprep.mubr.bf16.mxu0 %v588
      %1229 = vmatmul.mubr.bf16.gmra.mrb[0].mxu0 %v584
      %v1230 = vpop.f32.mrb[0].mxu0
      %v1231 = vadd.f32 0.0, %v1230
      %v1232 = vpop.f32.mrb[0].mxu0
      %v1233 = vpop.f32.mrb[0].mxu0
      %v1234 = vadd.f32 0.0, %v1233
      %v1235 = vpop.f32.mrb[0].mxu0
      %1236 = vmatprep.mubr.bf16.mxu0 %v589
      %1237 = vmatmul.mubr.bf16.gmra.mrb[0].mxu0 %v585
      %v1238 = vpop.f32.mrb[0].mxu0
      %v1239 = vadd.f32 0.0, %v1238
      %v1240 = vpop.f32.mrb[0].mxu0
      %v1241 = vpop.f32.mrb[0].mxu0
      %v1242 = vadd.f32 0.0, %v1241
      %v1243 = vpop.f32.mrb[0].mxu0
      %1244 = vmatprep.mubr.bf16.mxu0 %v590
      %1245 = vmatmul.mubr.bf16.gmra.mrb[0].mxu0 %v586
      %v1246 = vpop.f32.mrb[0].mxu0
      %v1247 = vadd.f32 0.0, %v1246
      %v1248 = vpop.f32.mrb[0].mxu0
      %v1249 = vpop.f32.mrb[0].mxu0
      %v1250 = vadd.f32 0.0, %v1249
      %v1251 = vpop.f32.mrb[0].mxu0
      %1252 = vmatprep.mubr.bf16.mxu0 %v591
      %1253 = vmatmul.mubr.bf16.gmra.mrb[0].mxu0 %v587
      %v1254 = vpop.f32.mrb[0].mxu0
      %v1255 = vadd.f32 0.0, %v1254
      %v1256 = vpop.f32.mrb[0].mxu0
      %v1257 = vpop.f32.mrb[0].mxu0
      %v1258 = vadd.f32 0.0, %v1257
      %v1259 = vpop.f32.mrb[0].mxu0
      %1260 = vdwg.mxu0
      %1261 = vmatprep.subr.bf16.mxu0 0
      %1262 = vmatpush1.bf16.msra.mxu0 %v1068
      %1263 = vmatprep.subr.bf16.mxu0 0
      %1264 = vmatpush1.bf16.msra.mxu0 %v1069
      %1265 = vmatprep.subr.bf16.mxu0 0
      %1266 = vmatpush1.bf16.msra.mxu0 %v1070
      %1267 = vmatprep.subr.bf16.mxu0 0
      %1268 = vmatpush1.bf16.msra.mxu0 %v1071
      %1269 = vmatprep.subr.bf16.mxu0 0
      %1270 = vmatpush1.bf16.msra.mxu0 %v1072
      %1271 = vmatprep.subr.bf16.mxu0 0
      %1272 = vmatpush1.bf16.msra.mxu0 %v1073
      %1273 = vmatprep.subr.bf16.mxu0 0
      %1274 = vmatpush1.bf16.msra.mxu0 %v1074
      %1275 = vmatprep.subr.bf16.mxu0 0
      %1276 = vmatpush1.bf16.msra.mxu0 %v1075
      %1277 = vmatprep.subr.bf16.mxu0 0
      %1278 = vmatpush1.bf16.msra.mxu0 %v1076
      %1279 = vmatprep.subr.bf16.mxu0 0
      %1280 = vmatpush1.bf16.msra.mxu0 %v1077
      %1281 = vmatprep.subr.bf16.mxu0 0
      %1282 = vmatpush1.bf16.msra.mxu0 %v1078
      %1283 = vmatprep.subr.bf16.mxu0 0
      %1284 = vmatpush1.bf16.msra.mxu0 %v1079
      %1285 = vmatprep.subr.bf16.mxu0 0
      %1286 = vmatpush1.bf16.msra.mxu0 %v1080
      %1287 = vmatprep.subr.bf16.mxu0 0
      %1288 = vmatpush1.bf16.msra.mxu0 %v1081
      %1289 = vmatprep.subr.bf16.mxu0 0
      %1290 = vmatpush1.bf16.msra.mxu0 %v1082
      %1291 = vmatprep.subr.bf16.mxu0 0
      %1292 = vmatpush1.bf16.msra.mxu0 %v1083
      %1293 = vmatprep.mubr.bf16.mxu0 %v596
      %1294 = vmatmul.mubr.bf16.gmra.mrb[0].mxu0 %v592
      %v1295 = vpop.f32.mrb[0].mxu0
      %v1296 = vadd.f32 %v1231, %v1295
      %v1297 = vpop.f32.mrb[0].mxu0
      %v1298 = vpop.f32.mrb[0].mxu0
      %v1299 = vadd.f32 %v1234, %v1298
      %v1300 = vpop.f32.mrb[0].mxu0
      %1301 = vmatprep.mubr.bf16.mxu0 %v597
      %1302 = vmatmul.mubr.bf16.gmra.mrb[0].mxu0 %v593
      %v1303 = vpop.f32.mrb[0].mxu0
      %v1304 = vadd.f32 %v1239, %v1303
      %v1305 = vpop.f32.mrb[0].mxu0
      %v1306 = vpop.f32.mrb[0].mxu0
      %v1307 = vadd.f32 %v1242, %v1306
      %v1308 = vpop.f32.mrb[0].mxu0
      %1309 = vmatprep.mubr.bf16.mxu0 %v598
      %1310 = vmatmul.mubr.bf16.gmra.mrb[0].mxu0 %v594
      %v1311 = vpop.f32.mrb[0].mxu0
      %v1312 = vadd.f32 %v1247, %v1311
      %v1313 = vpop.f32.mrb[0].mxu0
      %v1314 = vpop.f32.mrb[0].mxu0
      %v1315 = vadd.f32 %v1250, %v1314
      %v1316 = vpop.f32.mrb[0].mxu0
      %1317 = vmatprep.mubr.bf16.mxu0 %v599
      %1318 = vmatmul.mubr.bf16.gmra.mrb[0].mxu0 %v595
      %v1319 = vpop.f32.mrb[0].mxu0
      %v1320 = vadd.f32 %v1255, %v1319
      %v1321 = vpop.f32.mrb[0].mxu0
      %v1322 = vpop.f32.mrb[0].mxu0
      %v1323 = vadd.f32 %v1258, %v1322
      %v1324 = vpop.f32.mrb[0].mxu0
      %1325 = vdwg.mxu0
      %1326 = vmatprep.subr.bf16.mxu0 0
      %1327 = vmatpush1.bf16.msra.mxu0 %v1084
      %1328 = vmatprep.subr.bf16.mxu0 0
      %1329 = vmatpush1.bf16.msra.mxu0 %v1085
      %1330 = vmatprep.subr.bf16.mxu0 0
      %1331 = vmatpush1.bf16.msra.mxu0 %v1086
      %1332 = vmatprep.subr.bf16.mxu0 0
      %1333 = vmatpush1.bf16.msra.mxu0 %v1087
      %1334 = vmatprep.subr.bf16.mxu0 0
      %1335 = vmatpush1.bf16.msra.mxu0 %v1088
      %1336 = vmatprep.subr.bf16.mxu0 0
      %1337 = vmatpush1.bf16.msra.mxu0 %v1089
      %1338 = vmatprep.subr.bf16.mxu0 0
      %1339 = vmatpush1.bf16.msra.mxu0 %v1090
      %1340 = vmatprep.subr.bf16.mxu0 0
      %1341 = vmatpush1.bf16.msra.mxu0 %v1091
      %1342 = vmatprep.subr.bf16.mxu0 0
      %1343 = vmatpush1.bf16.msra.mxu0 %v1092
      %1344 = vmatprep.subr.bf16.mxu0 0
      %1345 = vmatpush1.bf16.msra.mxu0 %v1093
      %1346 = vmatprep.subr.bf16.mxu0 0
      %1347 = vmatpush1.bf16.msra.mxu0 %v1094
      %1348 = vmatprep.subr.bf16.mxu0 0
      %1349 = vmatpush1.bf16.msra.mxu0 %v1095
      %1350 = vmatprep.subr.bf16.mxu0 0
      %1351 = vmatpush1.bf16.msra.mxu0 %v1096
      %1352 = vmatprep.subr.bf16.mxu0 0
      %1353 = vmatpush1.bf16.msra.mxu0 %v1097
      %1354 = vmatprep.subr.bf16.mxu0 0
      %1355 = vmatpush1.bf16.msra.mxu0 %v1098
      %1356 = vmatprep.subr.bf16.mxu0 0
      %1357 = vmatpush1.bf16.msra.mxu0 %v1099
      %1358 = vmatprep.mubr.bf16.mxu0 %v604
      %1359 = vmatmul.mubr.bf16.gmra.mrb[0].mxu0 %v600
      %v1360 = vpop.f32.mrb[0].mxu0
      %v1361 = vadd.f32 %v1296, %v1360
      %v1362 = vpop.f32.mrb[0].mxu0
      %v1363 = vpop.f32.mrb[0].mxu0
      %v1364 = vadd.f32 %v1299, %v1363
      %v1365 = vpop.f32.mrb[0].mxu0
      %1366 = vmatprep.mubr.bf16.mxu0 %v605
      %1367 = vmatmul.mubr.bf16.gmra.mrb[0].mxu0 %v601
      %v1368 = vpop.f32.mrb[0].mxu0
      %v1369 = vadd.f32 %v1304, %v1368
      %v1370 = vpop.f32.mrb[0].mxu0
      %v1371 = vpop.f32.mrb[0].mxu0
      %v1372 = vadd.f32 %v1307, %v1371
      %v1373 = vpop.f32.mrb[0].mxu0
      %1374 = vmatprep.mubr.bf16.mxu0 %v606
      %1375 = vmatmul.mubr.bf16.gmra.mrb[0].mxu0 %v602
      %v1376 = vpop.f32.mrb[0].mxu0
      %v1377 = vadd.f32 %v1312, %v1376
      %v1378 = vpop.f32.mrb[0].mxu0
      %v1379 = vpop.f32.mrb[0].mxu0
      %v1380 = vadd.f32 %v1315, %v1379
      %v1381 = vpop.f32.mrb[0].mxu0
      %1382 = vmatprep.mubr.bf16.mxu0 %v607
      %1383 = vmatmul.mubr.bf16.gmra.mrb[0].mxu0 %v603
      %v1384 = vpop.f32.mrb[0].mxu0
      %v1385 = vadd.f32 %v1320, %v1384
      %v1386 = vpop.f32.mrb[0].mxu0
      %v1387 = vpop.f32.mrb[0].mxu0
      %v1388 = vadd.f32 %v1323, %v1387
      %v1389 = vpop.f32.mrb[0].mxu0
      %1390 = vdwg.mxu0
      %1391 = vmatprep.subr.bf16.mxu0 0
      %1392 = vmatpush1.bf16.msra.mxu0 %v1100
      %1393 = vmatprep.subr.bf16.mxu0 0
      %1394 = vmatpush1.bf16.msra.mxu0 %v1101
      %1395 = vmatprep.subr.bf16.mxu0 0
      %1396 = vmatpush1.bf16.msra.mxu0 %v1102
      %1397 = vmatprep.subr.bf16.mxu0 0
      %1398 = vmatpush1.bf16.msra.mxu0 %v1103
      %1399 = vmatprep.subr.bf16.mxu0 0
      %1400 = vmatpush1.bf16.msra.mxu0 %v1104
      %1401 = vmatprep.subr.bf16.mxu0 0
      %1402 = vmatpush1.bf16.msra.mxu0 %v1105
      %1403 = vmatprep.subr.bf16.mxu0 0
      %1404 = vmatpush1.bf16.msra.mxu0 %v1106
      %1405 = vmatprep.subr.bf16.mxu0 0
      %1406 = vmatpush1.bf16.msra.mxu0 %v1107
      %1407 = vmatprep.subr.bf16.mxu0 0
      %1408 = vmatpush1.bf16.msra.mxu0 %v1108
      %1409 = vmatprep.subr.bf16.mxu0 0
      %1410 = vmatpush1.bf16.msra.mxu0 %v1109
      %1411 = vmatprep.subr.bf16.mxu0 0
      %1412 = vmatpush1.bf16.msra.mxu0 %v1110
      %1413 = vmatprep.subr.bf16.mxu0 0
      %1414 = vmatpush1.bf16.msra.mxu0 %v1111
      %1415 = vmatprep.subr.bf16.mxu0 0
      %1416 = vmatpush1.bf16.msra.mxu0 %v1112
      %1417 = vmatprep.subr.bf16.mxu0 0
      %1418 = vmatpush1.bf16.msra.mxu0 %v1113
      %1419 = vmatprep.subr.bf16.mxu0 0
      %1420 = vmatpush1.bf16.msra.mxu0 %v1114
      %1421 = vmatprep.subr.bf16.mxu0 0
      %1422 = vmatpush1.bf16.msra.mxu0 %v1115
      %1423 = vmatprep.mubr.bf16.mxu0 %v612
      %1424 = vmatmul.mubr.bf16.gmra.mrb[0].mxu0 %v608
      %v1425 = vpop.f32.mrb[0].mxu0
      %v1426 = vadd.f32 %v1361, %v1425
      %v1427 = vpop.f32.mrb[0].mxu0
      %v1428 = vpop.f32.mrb[0].mxu0
      %v1429 = vadd.f32 %v1364, %v1428
      %v1430 = vpop.f32.mrb[0].mxu0
      %1431 = vmatprep.mubr.bf16.mxu0 %v613
      %1432 = vmatmul.mubr.bf16.gmra.mrb[0].mxu0 %v609
      %v1433 = vpop.f32.mrb[0].mxu0
      %v1434 = vadd.f32 %v1369, %v1433
      %v1435 = vpop.f32.mrb[0].mxu0
      %v1436 = vpop.f32.mrb[0].mxu0
      %v1437 = vadd.f32 %v1372, %v1436
      %v1438 = vpop.f32.mrb[0].mxu0
      %1439 = vmatprep.mubr.bf16.mxu0 %v614
      %1440 = vmatmul.mubr.bf16.gmra.mrb[0].mxu0 %v610
      %v1441 = vpop.f32.mrb[0].mxu0
      %v1442 = vadd.f32 %v1377, %v1441
      %v1443 = vpop.f32.mrb[0].mxu0
      %v1444 = vpop.f32.mrb[0].mxu0
      %v1445 = vadd.f32 %v1380, %v1444
      %v1446 = vpop.f32.mrb[0].mxu0
      %1447 = vmatprep.mubr.bf16.mxu0 %v615
      %1448 = vmatmul.mubr.bf16.gmra.mrb[0].mxu0 %v611
      %v1449 = vpop.f32.mrb[0].mxu0
      %v1450 = vadd.f32 %v1385, %v1449
      %v1451 = vpop.f32.mrb[0].mxu0
      %v1452 = vpop.f32.mrb[0].mxu0
      %v1453 = vadd.f32 %v1388, %v1452
      %v1454 = vpop.f32.mrb[0].mxu0
      %1455 = vdwg.mxu0
      %1456 = vmatprep.subr.bf16.mxu0 0
      %1457 = vmatpush1.bf16.msra.mxu0 %v1116
      %1458 = vmatprep.subr.bf16.mxu0 0
      %1459 = vmatpush1.bf16.msra.mxu0 %v1117
      %1460 = vmatprep.subr.bf16.mxu0 0
      %1461 = vmatpush1.bf16.msra.mxu0 %v1118
      %1462 = vmatprep.subr.bf16.mxu0 0
      %1463 = vmatpush1.bf16.msra.mxu0 %v1119
      %1464 = vmatprep.subr.bf16.mxu0 0
      %1465 = vmatpush1.bf16.msra.mxu0 %v1120
      %1466 = vmatprep.subr.bf16.mxu0 0
      %1467 = vmatpush1.bf16.msra.mxu0 %v1121
      %1468 = vmatprep.subr.bf16.mxu0 0
      %1469 = vmatpush1.bf16.msra.mxu0 %v1122
      %1470 = vmatprep.subr.bf16.mxu0 0
      %1471 = vmatpush1.bf16.msra.mxu0 %v1123
      %1472 = vmatprep.subr.bf16.mxu0 0
      %1473 = vmatpush1.bf16.msra.mxu0 0
      %1474 = vmatprep.subr.bf16.mxu0 0
      %1475 = vmatpush1.bf16.msra.mxu0 0
      %1476 = vmatprep.subr.bf16.mxu0 0
      %1477 = vmatpush1.bf16.msra.mxu0 0
      %1478 = vmatprep.subr.bf16.mxu0 0
      %1479 = vmatpush1.bf16.msra.mxu0 0
      %1480 = vmatprep.subr.bf16.mxu0 0
      %1481 = vmatpush1.bf16.msra.mxu0 0
      %1482 = vmatprep.subr.bf16.mxu0 0
      %1483 = vmatpush1.bf16.msra.mxu0 0
      %1484 = vmatprep.subr.bf16.mxu0 0
      %1485 = vmatpush1.bf16.msra.mxu0 0
      %1486 = vmatprep.subr.bf16.mxu0 0
      %1487 = vmatpush1.bf16.msra.mxu0 0
      %1488 = vmatprep.mubr.bf16.mxu0 0
      %1489 = vmatmul.mubr.bf16.gmra.mrb[0].mxu0 %v616
      %v1490 = vpop.f32.mrb[0].mxu0
      %v1491 = vadd.f32 %v1426, %v1490
      %v1492 = vpop.f32.mrb[0].mxu0
      %v1493 = vpop.f32.mrb[0].mxu0
      %v1494 = vadd.f32 %v1429, %v1493
      %v1495 = vpop.f32.mrb[0].mxu0
      %1496 = vmatprep.mubr.bf16.mxu0 0
      %1497 = vmatmul.mubr.bf16.gmra.mrb[0].mxu0 %v617
      %v1498 = vpop.f32.mrb[0].mxu0
      %v1499 = vadd.f32 %v1434, %v1498
      %v1500 = vpop.f32.mrb[0].mxu0
      %v1501 = vpop.f32.mrb[0].mxu0
      %v1502 = vadd.f32 %v1437, %v1501
      %v1503 = vpop.f32.mrb[0].mxu0
      %1504 = vmatprep.mubr.bf16.mxu0 0
      %1505 = vmatmul.mubr.bf16.gmra.mrb[0].mxu0 %v618
      %v1506 = vpop.f32.mrb[0].mxu0
      %v1507 = vadd.f32 %v1442, %v1506
      %v1508 = vpop.f32.mrb[0].mxu0
      %v1509 = vpop.f32.mrb[0].mxu0
      %v1510 = vadd.f32 %v1445, %v1509
      %v1511 = vpop.f32.mrb[0].mxu0
      %1512 = vmatprep.mubr.bf16.mxu0 0
      %1513 = vmatmul.mubr.bf16.gmra.mrb[0].mxu0 %v619
      %v1514 = vpop.f32.mrb[0].mxu0
      %v1515 = vadd.f32 %v1450, %v1514
      %v1516 = vpop.f32.mrb[0].mxu0
      %v1517 = vpop.f32.mrb[0].mxu0
      %v1518 = vadd.f32 %v1453, %v1517
      %v1519 = vpop.f32.mrb[0].mxu0
      %1520 = vdwg.mxu0
      %v1521 = vadd.f32 %v443, %v444
      %v1522 = vadd.f32 %v1521, %v445
      %v1523 = vadd.f32 %v1522, %v446
      %v1524 = vadd.f32 %v1523, %v447
      %v1525 = vadd.f32 %v1524, %v448
      %v1526 = vadd.f32 %v1525, %v449
      %v1527 = vadd.f32 %v1526, %v450
      %v1528 = vrot.slane %v1527, 4
      %v1529 = vadd.f32 %v1527, %v1528
      %v1530 = vrot.slane %v1529, 2
      %v1531 = vadd.f32 %v1529, %v1530
      %v1532 = vrot.slane %v1531, 1
      %v1533 = vadd.f32 %v1531, %v1532
      %v1534 = vrcp.pop 64.0
      %v1535 = vmul.f32 %v1533, %v1534
      %v1536 = vpack.c.bf16 %v1535, %v1535
      %v1537 = vld [vmem:[%s3] sm:$0xf]
      %v1538 = vld [vmem:[%s3 + $0x4] sm:$0xf]
      %v1539 = vld [vmem:[%s3 + $0x8] sm:$0xf]
      %v1540 = vld [vmem:[%s3 + $0xc] sm:$0xf]
      %v1541 = vld [vmem:[%s3 + $0x10] sm:$0xf]
      %v1542 = vld [vmem:[%s3 + $0x14] sm:$0xf]
      %v1543 = vld [vmem:[%s3 + $0x18] sm:$0xf]
      %v1544 = vld [vmem:[%s3 + $0x1c] sm:$0xf]
      %v1545 = vld [vmem:[%s3 + $0x20] sm:$0xf]
      %v1546 = vld [vmem:[%s3 + $0x24] sm:$0xf]
      %v1547 = vld [vmem:[%s3 + $0x28] sm:$0xf]
      %v1548 = vld [vmem:[%s3 + $0x2c] sm:$0xf]
      %v1549 = vld [vmem:[%s3 + $0x30] sm:$0xf]
      %v1550 = vld [vmem:[%s3 + $0x34] sm:$0xf]
      %v1551 = vld [vmem:[%s3 + $0x38] sm:$0xf]
      %v1552 = vld [vmem:[%s3 + $0x3c] sm:$0xf]
      %v1569 = vunpack.c.l.b16 %v1537
      %v1570 = vunpack.c.l.b16 %v1538
      %v1571 = vunpack.c.l.b16 %v1539
      %v1572 = vunpack.c.l.b16 %v1540
      %v1573 = vunpack.c.l.b16 %v1541
      %v1574 = vunpack.c.l.b16 %v1542
      %v1575 = vunpack.c.l.b16 %v1543
      %v1576 = vunpack.c.l.b16 %v1544
      %v1577 = vunpack.c.l.b16 %v1545
      %v1578 = vunpack.c.l.b16 %v1546
      %v1579 = vunpack.c.l.b16 %v1547
      %v1580 = vunpack.c.l.b16 %v1548
      %v1581 = vunpack.c.l.b16 %v1549
      %v1582 = vunpack.c.l.b16 %v1550
      %v1583 = vunpack.c.l.b16 %v1551
      %v1584 = vunpack.c.l.b16 %v1552
      %v1585 = vpack.c.b16 %v1570, %v1569
      %v1586 = vpack.c.b16 %v1572, %v1571
      %v1587 = vpack.c.b16 %v1574, %v1573
      %v1588 = vpack.c.b16 %v1576, %v1575
      %v1589 = vpack.c.b16 %v1578, %v1577
      %v1590 = vpack.c.b16 %v1580, %v1579
      %v1591 = vpack.c.b16 %v1582, %v1581
      %v1592 = vpack.c.b16 %v1584, %v1583
      %1601 = vmatprep.subr.bf16.mxu0 0
      %1602 = vmatpush1.bf16.msra.mxu0 %v1585
      %1603 = vmatprep.subr.bf16.mxu0 0
      %1604 = vmatpush1.bf16.msra.mxu0 %v1586
      %1605 = vmatprep.subr.bf16.mxu0 0
      %1606 = vmatpush1.bf16.msra.mxu0 %v1587
      %1607 = vmatprep.subr.bf16.mxu0 0
      %1608 = vmatpush1.bf16.msra.mxu0 %v1588
      %1609 = vmatprep.subr.bf16.mxu0 0
      %1610 = vmatpush1.bf16.msra.mxu0 %v1589
      %1611 = vmatprep.subr.bf16.mxu0 0
      %1612 = vmatpush1.bf16.msra.mxu0 %v1590
      %1613 = vmatprep.subr.bf16.mxu0 0
      %1614 = vmatpush1.bf16.msra.mxu0 %v1591
      %1615 = vmatprep.subr.bf16.mxu0 0
      %1616 = vmatpush1.bf16.msra.mxu0 %v1592
      %1617 = vmatprep.subr.bf16.mxu0 0
      %1618 = vmatpush1.bf16.msra.mxu0 0
      %1619 = vmatprep.subr.bf16.mxu0 0
      %1620 = vmatpush1.bf16.msra.mxu0 0
      %1621 = vmatprep.subr.bf16.mxu0 0
      %1622 = vmatpush1.bf16.msra.mxu0 0
      %1623 = vmatprep.subr.bf16.mxu0 0
      %1624 = vmatpush1.bf16.msra.mxu0 0
      %1625 = vmatprep.subr.bf16.mxu0 0
      %1626 = vmatpush1.bf16.msra.mxu0 0
      %1627 = vmatprep.subr.bf16.mxu0 0
      %1628 = vmatpush1.bf16.msra.mxu0 0
      %1629 = vmatprep.subr.bf16.mxu0 0
      %1630 = vmatpush1.bf16.msra.mxu0 0
      %1631 = vmatprep.subr.bf16.mxu0 0
      %1632 = vmatpush1.bf16.msra.mxu0 0
      %1633 = vmatprep.mubr.bf16.mxu0 0
      %1634 = vmatmul.mubr.bf16.gmra.mrb[0].mxu0 %v1536
      %v1635 = vpop.f32.mrb[0].mxu0
      %v1636 = vadd.f32 0.0, %v1635
      %v1637 = vpop.f32.mrb[0].mxu0
      %v1638 = vpop.f32.mrb[0].mxu0
      %v1639 = vpop.f32.mrb[0].mxu0
      %1640 = vdwg.mxu0
      %v1641 = vxor.u32 %v1636, 2147483648
      %v1642 = vmul.f32 %v1641, 1.442695
      %v1643 = vpow.pop %v1642
      %v1644 = vadd.f32 %v1643, 1.0
      %v1645 = vrcp.pop %v1644
      %v1646 = vmul.f32 1.0, %v1645
      %1647 = vst [vmem:[%s265] sm:$0xff] %v554
      %1648 = vst [vmem:[%s265 + $0x8] sm:$0xff] %v557
      %1649 = vst [vmem:[%s265 + $0x10] sm:$0xff] %v562
      %1650 = vst [vmem:[%s265 + $0x18] sm:$0xff] %v565
      %1651 = vst [vmem:[%s265 + $0x20] sm:$0xff] %v570
      %1652 = vst [vmem:[%s265 + $0x28] sm:$0xff] %v573
      %1653 = vst [vmem:[%s265 + $0x30] sm:$0xff] %v578
      %1654 = vst [vmem:[%s265 + $0x38] sm:$0xff] %v581
      %1655 = vst [vmem:[%s270] sm:$0xff] %v1491
      %1656 = vst [vmem:[%s270 + $0x8] sm:$0xff] %v1494
      %1657 = vst [vmem:[%s270 + $0x10] sm:$0xff] %v1499
      %1658 = vst [vmem:[%s270 + $0x18] sm:$0xff] %v1502
      %1659 = vst [vmem:[%s270 + $0x20] sm:$0xff] %v1507
      %1660 = vst [vmem:[%s270 + $0x28] sm:$0xff] %v1510
      %1661 = vst [vmem:[%s270 + $0x30] sm:$0xff] %v1515
      %1662 = vst [vmem:[%s270 + $0x38] sm:$0xff] %v1518
      %v1663 = vadd.f32 %v554, %v557
      %v1664 = vadd.f32 %v1663, %v562
      %v1665 = vadd.f32 %v1664, %v565
      %v1666 = vadd.f32 %v1665, %v570
      %v1667 = vadd.f32 %v1666, %v573
      %v1668 = vadd.f32 %v1667, %v578
      %v1669 = vadd.f32 %v1668, %v581
      %v1670 = vrot.slane %v1669, 4
      %v1671 = vadd.f32 %v1669, %v1670
      %v1672 = vrot.slane %v1671, 2
      %v1673 = vadd.f32 %v1671, %v1672
      %v1674 = vrot.slane %v1673, 1
      %v1675 = vadd.f32 %v1673, %v1674
      %1676 = vst [vmem:[%s274] sm:$0x1] %v1675
      %v1677 = vmul.f32 %v554, %v554
      %v1678 = vmul.f32 %v557, %v557
      %v1679 = vmul.f32 %v562, %v562
      %v1680 = vmul.f32 %v565, %v565
      %v1681 = vmul.f32 %v570, %v570
      %v1682 = vmul.f32 %v573, %v573
      %v1683 = vmul.f32 %v578, %v578
      %v1684 = vmul.f32 %v581, %v581
      %v1685 = vadd.f32 %v1677, %v1678
      %v1686 = vadd.f32 %v1685, %v1679
      %v1687 = vadd.f32 %v1686, %v1680
      %v1688 = vadd.f32 %v1687, %v1681
      %v1689 = vadd.f32 %v1688, %v1682
      %v1690 = vadd.f32 %v1689, %v1683
      %v1691 = vadd.f32 %v1690, %v1684
      %v1692 = vrot.slane %v1691, 4
      %v1693 = vadd.f32 %v1691, %v1692
      %v1694 = vrot.slane %v1693, 2
      %v1695 = vadd.f32 %v1693, %v1694
      %v1696 = vrot.slane %v1695, 1
      %v1697 = vadd.f32 %v1695, %v1696
      %1698 = vst [vmem:[%s274 + $0x1] sm:$0x1] %v1697
      %v1699 = vadd.f32 %v1491, %v1494
      %v1700 = vadd.f32 %v1699, %v1499
      %v1701 = vadd.f32 %v1700, %v1502
      %v1702 = vadd.f32 %v1701, %v1507
      %v1703 = vadd.f32 %v1702, %v1510
      %v1704 = vadd.f32 %v1703, %v1515
      %v1705 = vadd.f32 %v1704, %v1518
      %v1706 = vrot.slane %v1705, 4
      %v1707 = vadd.f32 %v1705, %v1706
      %v1708 = vrot.slane %v1707, 2
      %v1709 = vadd.f32 %v1707, %v1708
      %v1710 = vrot.slane %v1709, 1
      %v1711 = vadd.f32 %v1709, %v1710
      %1712 = vst [vmem:[%s274 + $0x2] sm:$0x1] %v1711
      %v1713 = vmul.f32 %v1491, %v1491
      %v1714 = vmul.f32 %v1494, %v1494
      %v1715 = vmul.f32 %v1499, %v1499
      %v1716 = vmul.f32 %v1502, %v1502
      %v1717 = vmul.f32 %v1507, %v1507
      %v1718 = vmul.f32 %v1510, %v1510
      %v1719 = vmul.f32 %v1515, %v1515
      %v1720 = vmul.f32 %v1518, %v1518
      %v1721 = vadd.f32 %v1713, %v1714
      %v1722 = vadd.f32 %v1721, %v1715
      %v1723 = vadd.f32 %v1722, %v1716
      %v1724 = vadd.f32 %v1723, %v1717
      %v1725 = vadd.f32 %v1724, %v1718
      %v1726 = vadd.f32 %v1725, %v1719
      %v1727 = vadd.f32 %v1726, %v1720
      %v1728 = vrot.slane %v1727, 4
      %v1729 = vadd.f32 %v1727, %v1728
      %v1730 = vrot.slane %v1729, 2
      %v1731 = vadd.f32 %v1729, %v1730
      %v1732 = vrot.slane %v1731, 1
      %v1733 = vadd.f32 %v1731, %v1732
      %1734 = vst [vmem:[%s274 + $0x3] sm:$0x1] %v1733
      %1735 = vst [vmem:[%s274 + $0x4] sm:$0x1] %v1646
      %1736 = vst [vmem:[%s274 + $0x5] sm:$0x7] 0.0
      %p1737 = scmp.lt.s32.totalorder %s18, 1
      %s1738 = scalar_select %p1737, %s18, 1
      %s1739 = smul.addr %s1738, 8
      %s1740 = smul.addr %s1739, 8
      %s1741 = scalar_lea.vmem %s4, %s1740
      %p1742 = scmp.lt.s32.totalorder %s18, 1
      %s1743 = scalar_select %p1742, %s18, 1
      %s1744 = smul.addr %s1743, 8
      %s1745 = smul.addr %s1744, 8
      %s1746 = scalar_lea.vmem %s5, %s1745
      %p1747 = scmp.lt.s32.totalorder %s18, 1
      %s1748 = scalar_select %p1747, %s18, 1
      %s1749 = smul.addr %s1748, 8
      %s1750 = scalar_lea.vmem %s6, %s1749
      // Predicated region
      $region37: #{downsample_forward.2} parent=35 // pred_check
        %p1751 = pneg %p125
      $region38: #{downsample_forward.2} parent=35 // pred_check_branch
        %1753 = sbr.rel (%p1751) target = $region40
      $region39: #{downsample_forward.2} parent=35 // pred_region
        _
      $region40: #{downsample_forward.2} parent=35 // pred_fallthru
        _
      // Predicated region
      $region41: #{downsample_forward.2} parent=35 // pred_check
        %p1754 = pneg %p151
      $region42: #{downsample_forward.2} parent=35 // pred_check_branch
        %1756 = sbr.rel (%p1754) target = $region44
      $region43: #{downsample_forward.2} parent=35 // pred_region
        _
      $region44: #{downsample_forward.2} parent=35 // pred_fallthru
        _
      // Predicated region
      $region45: #{downsample_forward.2} parent=35 // pred_check
        %p1757 = pneg %p177
      $region46: #{downsample_forward.2} parent=35 // pred_check_branch
        %1759 = sbr.rel (%p1757) target = $region48
      $region47: #{downsample_forward.2} parent=35 // pred_region
        _
      $region48: #{downsample_forward.2} parent=35 // pred_fallthru
        _
    $region36: #{downsample_forward.2} parent=5 // pred_fallthru
      _
    %p1760 = scmp.le.s32.totalorder 2, %s13
    // Predicated region
    $region49: #{downsample_forward.2} parent=5 // pred_check
      %p1761 = pneg %p1760
    $region50: #{downsample_forward.2} parent=5 // pred_check_branch
      %1763 = sbr.rel (%p1761) target = $region52
    $region51: #{downsample_forward.2} parent=5 // pred_region
      %s1764 = ssub.s32 %s13, 2
      // Predicated region
      $region53: #{downsample_forward.2} parent=51 // pred_check
        %p1765 = pneg %p131
      $region54: #{downsample_forward.2} parent=51 // pred_check_branch
        %1767 = sbr.rel (%p1765) target = $region56
      $region55: #{downsample_forward.2} parent=51 // pred_region
        %p1768 = scmp.lt.s32.totalorder %s19, 1
        %s1769 = scalar_select %p1768, %s19, 1
        %s1770 = smul.addr %s1769, 8
        %s1771 = smul.addr %s1770, 8
        %s1772 = scalar_lea.vmem %s4, %s1771
      $region56: #{downsample_forward.2} parent=51 // pred_fallthru
        _
      // Predicated region
      $region57: #{downsample_forward.2} parent=51 // pred_check
        %p1773 = pneg %p157
      $region58: #{downsample_forward.2} parent=51 // pred_check_branch
        %1775 = sbr.rel (%p1773) target = $region60
      $region59: #{downsample_forward.2} parent=51 // pred_region
        %p1776 = scmp.lt.s32.totalorder %s19, 1
        %s1777 = scalar_select %p1776, %s19, 1
        %s1778 = smul.addr %s1777, 8
        %s1779 = smul.addr %s1778, 8
        %s1780 = scalar_lea.vmem %s5, %s1779
      $region60: #{downsample_forward.2} parent=51 // pred_fallthru
        _
      // Predicated region
      $region61: #{downsample_forward.2} parent=51 // pred_check
        %p1781 = pneg %p183
      $region62: #{downsample_forward.2} parent=51 // pred_check_branch
        %1783 = sbr.rel (%p1781) target = $region64
      $region63: #{downsample_forward.2} parent=51 // pred_region
        %p1784 = scmp.lt.s32.totalorder %s19, 1
        %s1785 = scalar_select %p1784, %s19, 1
        %s1786 = smul.addr %s1785, 8
        %s1787 = scalar_lea.vmem %s6, %s1786
      $region64: #{downsample_forward.2} parent=51 // pred_fallthru
        _
    $region52: #{downsample_forward.2} parent=5 // pred_fallthru
      _
  $region6: #{downsample_forward.2} parent=0 // loop_footer
    %s17 = sadd.s32 1, %s13
  $region7: #{downsample_forward.2} parent=0 // loop_footer_branch
    %12 = sbr.rel target = $region3
  $region8: #{downsample_forward.2} parent=0 // loop_exit
    _

</llo_original>
